<compile_context>
chip_gen: v6e
topology: v6e:2x2x1
jax: 0.10.0
libtpu: 0.0.40
codegen_flags: <defaults>
</compile_context>

<pallas_src>
import functools

import jax
import jax.numpy as jnp
from jax.experimental import pallas as pl
from jax.experimental.pallas import tpu as pltpu


def _pick_batch_block(b, t, rows_target=256):
    """Largest divisor of b whose row slab (bb*t) reaches ~rows_target MXU rows."""
    # TODO(synk): use rows_target=128 when targeting v5e's 128x128 MXU.
    bb = max(1, min(b, -(-rows_target // max(t, 1))))
    while b % bb:
        bb -= 1
    return bb


# ----------------------------------------------------------------------------
# Fused kernel: one grid step per batch block of `bb` elements.
# ----------------------------------------------------------------------------
def fused_attention_kernel(x_ref, wqkv_ref, wu_ref, bu_ref, out_ref,
                           *, heads, emb, bb, seq):
    h, e, t = heads, emb, seq
    he = h * e

    # (bb, t, e) -> (bb*t, e) row slab filling the MXU M dimension across batch rows.
    x2d = x_ref[...].reshape(bb * t, e).astype(jnp.bfloat16)

    # Single lane-dense MXU matmul producing Q | K | V for every head & batch row.
    # Cast once to bf16 (halves the live footprint of the (bb*t, 3*h*e) intermediate).
    qkv = jnp.dot(x2d, wqkv_ref[...],
                  preferred_element_type=jnp.float32).astype(jnp.bfloat16)
    qkv = qkv.reshape(bb, t, 3 * he)

    # Per-head attention; heads are contiguous e-wide column slices (head-major layout,
    # identical to PyTorch's .view(b, t, h, e)).  The 1/sqrt(e) scale is already folded
    # into the Q weight columns, so no logit multiply here.
    # TODO(synk): switch to a bounded-unroll lax.fori_loop over head groups if h grows
    # large enough that the fully-unrolled body spills out of the 64 vregs.
    head_outs = []
    for j in range(h):
        q_j = qkv[:, :, j * e:(j + 1) * e]                           # (bb, t, e) bf16
        k_j = qkv[:, :, he + j * e:he + (j + 1) * e]                 # (bb, t, e) bf16
        v_j = qkv[:, :, 2 * he + j * e:2 * he + (j + 1) * e]         # (bb, t, e) bf16

        # Batched q @ k^T over the bb batch rows, no materialized transpose.
        scores = jax.lax.dot_general(
            q_j, k_j, (((2,), (2,)), ((0,), (0,))),
            preferred_element_type=jnp.float32)                      # (bb, t, t) f32

        scores = scores - jnp.max(scores, axis=-1, keepdims=True)
        p = jnp.exp(scores)
        p = p * pl.reciprocal(jnp.sum(p, axis=-1, keepdims=True))    # exact recip (EUP)

        o_j = jax.lax.dot_general(
            p.astype(jnp.bfloat16), v_j, (((2,), (1,)), ((0,), (0,))),
            preferred_element_type=jnp.float32)                      # (bb, t, e) f32
        head_outs.append(o_j.astype(jnp.bfloat16))

    # Head-merge entirely in registers (no VMEM scratch round trip), then one unifyheads
    # matmul with the full h*e contraction + bias.
    merged = jnp.concatenate(head_outs, axis=-1).reshape(bb * t, he)  # (bb*t, h*e) bf16
    y = jnp.dot(merged, wu_ref[...], preferred_element_type=jnp.float32)  # (bb*t, e) f32
    y = y + bu_ref[...]
    out_ref[...] = y.reshape(bb, t, e).astype(out_ref.dtype)


# ----------------------------------------------------------------------------
# Wrapper
# ----------------------------------------------------------------------------
def self_attention_wide(x, params, heads):
    b, t, e = x.shape
    h = heads
    he = h * e
    wk, wq, wv, wu, bu = params

    # One-time weight prep (constant-folded under jit):
    #   * fold the attention scale 1/sqrt(e) into the Q columns (== the reference's
    #     e**-0.25 scaling of both q and k),
    #   * pre-transpose to (in, out) and concatenate Q|K|V into one (e, 3*h*e) operand,
    #   * pre-cast MXU operands to bf16 (accumulation stays f32 inside the kernel).
    scale = 1.0 / float(e) ** 0.5
    wqkv = jnp.concatenate([wq.T * scale, wk.T, wv.T], axis=1).astype(jnp.bfloat16)
    wu_t = wu.T.astype(jnp.bfloat16)                      # (h*e, e)
    bu2d = bu.reshape(1, e).astype(jnp.float32)

    # Multiple batch elements per grid step -> large row slab per matmul, fewer steps.
    bb = _pick_batch_block(b, t)
    grid = (b // bb,)

    kernel = functools.partial(fused_attention_kernel, heads=h, emb=e, bb=bb, seq=t)

    flops = (2 * b * t * e * 3 * he          # QKV projection
             + 4 * b * h * t * t * e         # QK^T + PV
             + 2 * b * t * he * e)           # unifyheads
    bytes_accessed = (x.size * 4 + wqkv.size * 2 + wu_t.size * 2 + bu2d.size * 4
                      + b * t * e * 4)

    # Explicit VMEM budget sized to the actual resident set: x/out blocks double-buffer,
    # weights/bias are single-buffered whole-array VMEM residents.
    resident = (2 * 2 * bb * t * e * 4
                + (wqkv.size + wu_t.size) * 2 + bu2d.size * 4)
    working = (bb * t * 3 * he * 2            # bf16 qkv slab
               + bb * t * t * 4               # f32 logits (one head live at a time)
               + bb * t * he * 2              # bf16 merged head outputs
               + bb * t * e * 4)              # f32 unify result
    vmem_limit = int(min(64 << 20, max(4 * (resident + working), 16 << 20)))

    out = pl.pallas_call(
        kernel,
        grid=grid,
        in_specs=[
            pl.BlockSpec((bb, t, e), lambda i: (i, 0, 0)),
            # Whole-array VMEM residents: fetched once, single-buffered for the whole
            # grid (no per-step re-fetch, no double-buffer duplication of weights).
            pl.BlockSpec(memory_space=pltpu.MemorySpace.VMEM),
            pl.BlockSpec(memory_space=pltpu.MemorySpace.VMEM),
            pl.BlockSpec(memory_space=pltpu.MemorySpace.VMEM),
        ],
        out_specs=pl.BlockSpec((bb, t, e), lambda i: (i, 0, 0)),
        out_shape=jax.ShapeDtypeStruct((b, t, e), jnp.float32),
        compiler_params=pltpu.CompilerParams(
            dimension_semantics=("parallel",),
            vmem_limit_bytes=vmem_limit),
        cost_estimate=pl.CostEstimate(
            flops=flops,
            transcendentals=b * h * t * t,
            bytes_accessed=bytes_accessed),
    )(x, wqkv, wu_t, bu2d)
    return out


# ----------------------------------------------------------------------------
# Deterministic parameter init (mimics nn.Linear's U(-1/sqrt(fan_in), +...)).
# ----------------------------------------------------------------------------
def init_params(key, emb, heads):
    ks = jax.random.split(key, 5)
    bound_e = 1.0 / (emb ** 0.5)
    bound_he = 1.0 / ((heads * emb) ** 0.5)
    wk = jax.random.uniform(ks[0], (heads * emb, emb), jnp.float32, -bound_e, bound_e)
    wq = jax.random.uniform(ks[1], (heads * emb, emb), jnp.float32, -bound_e, bound_e)
    wv = jax.random.uniform(ks[2], (heads * emb, emb), jnp.float32, -bound_e, bound_e)
    wu = jax.random.uniform(ks[3], (emb, heads * emb), jnp.float32, -bound_he, bound_he)
    bu = jax.random.uniform(ks[4], (emb,), jnp.float32, -bound_he, bound_he)
    return wk, wq, wv, wu, bu


# ----------------------------------------------------------------------------
# Pure-JAX f32 reference (mirrors the PyTorch forward exactly) for verification.
# ----------------------------------------------------------------------------
def reference(x, params, heads):
    b, t, e = x.shape
    h = heads
    wk, wq, wv, wu, bu = params
    keys = (x @ wk.T).reshape(b, t, h, e)
    queries = (x @ wq.T).reshape(b, t, h, e)
    values = (x @ wv.T).reshape(b, t, h, e)
    keys = keys.transpose(0, 2, 1, 3).reshape(b * h, t, e)
    queries = queries.transpose(0, 2, 1, 3).reshape(b * h, t, e)
    values = values.transpose(0, 2, 1, 3).reshape(b * h, t, e)
    queries = queries / e ** 0.25
    keys = keys / e ** 0.25
    dot = jnp.einsum("bqe,bke->bqk", queries, keys)
    dot = jax.nn.softmax(dot, axis=2)
    out = jnp.einsum("bqk,bke->bqe", dot, values).reshape(b, h, t, e)
    out = out.transpose(0, 2, 1, 3).reshape(b, t, h * e)
    return out @ wu.T + bu


if __name__ == "__main__":
    B, T, E, H = 2, 8, 32, 8
    key = jax.random.PRNGKey(0)
    kx, kp = jax.random.split(key)
    x = jax.random.normal(kx, (B, T, E), jnp.float32)
    params = init_params(kp, E, H)

    out = self_attention_wide(x, params, H)
    out = jax.block_until_ready(out)

    ref = reference(x, params, H)
    assert out.shape == (B, T, E), out.shape
    max_err = float(jnp.max(jnp.abs(out - ref)))
    # bf16 MXU operands with f32 accumulation -> small numeric delta vs. the pure-f32
    # reference; well within 2e-2 at these magnitudes.
    assert jnp.allclose(out, ref, atol=2e-2, rtol=2e-2), \
        f"mismatch vs reference (max abs err {max_err})"
    print("KERNEL_OK")
</pallas_src>

<mosaic_0001>
module attributes {stable_mosaic.version = 11 : i64} {
  func.func @fused_attention_kernel(%arg0: i32, %arg1: memref<2x8x32xf32, #tpu.memory_space<vmem>>, %arg2: memref<32x768xbf16, #tpu.memory_space<vmem>>, %arg3: memref<256x32xbf16, #tpu.memory_space<vmem>>, %arg4: memref<1x32xf32, #tpu.memory_space<vmem>>, %arg5: memref<2x8x32xf32, #tpu.memory_space<vmem>>) attributes {dimension_semantics = [#tpu.dimension_semantics<parallel>], iteration_bounds = array<i64: 1>, scalar_prefetch = 0 : i64, scratch_operands = 0 : i64, tpu.core_type = #tpu.core_type<tc>, window_params = [{transform_indices = @transform_0, window_bounds = array<i64: 2, 8, 32>}, {pipeline_mode = #tpu.pipeline_mode<synchronous>, transform_indices = @transform_1, window_bounds = array<i64: 32, 768>}, {pipeline_mode = #tpu.pipeline_mode<synchronous>, transform_indices = @transform_2, window_bounds = array<i64: 256, 32>}, {pipeline_mode = #tpu.pipeline_mode<synchronous>, transform_indices = @transform_3, window_bounds = array<i64: 1, 32>}, {transform_indices = @transform_4, window_bounds = array<i64: 2, 8, 32>}]} {
    %c0 = arith.constant 0 : index
    %c0_0 = arith.constant 0 : index
    %c0_1 = arith.constant 0 : index
    %0 = vector.load %arg1[%c0, %c0_0, %c0_1] : memref<2x8x32xf32, #tpu.memory_space<vmem>>, vector<2x8x32xf32>
    %1 = vector.shape_cast %0 : vector<2x8x32xf32> to vector<16x32xf32>
    %2 = arith.truncf %1 : vector<16x32xf32> to vector<16x32xbf16>
    %c0_2 = arith.constant 0 : index
    %c0_3 = arith.constant 0 : index
    %3 = vector.load %arg2[%c0_2, %c0_3] : memref<32x768xbf16, #tpu.memory_space<vmem>>, vector<32x768xbf16>
    %cst = arith.constant dense<0.000000e+00> : vector<16x768xf32>
    %4 = tpu.matmul %2, %3, %cst {dimension_numbers = #tpu.dot_dimension_numbers<[1], [0], [0], [1], [0, 0, 1, 1], [], []>} : vector<16x32xbf16>, vector<32x768xbf16>, vector<16x768xf32> -> vector<16x768xf32>
    %5 = arith.truncf %4 : vector<16x768xf32> to vector<16x768xbf16>
    %6 = vector.shape_cast %5 : vector<16x768xbf16> to vector<2x8x768xbf16>
    %7 = vector.extract_strided_slice %6 {offsets = [0, 0, 0], sizes = [2, 8, 32], strides = [1, 1, 1]} : vector<2x8x768xbf16> to vector<2x8x32xbf16>
    %8 = vector.extract_strided_slice %6 {offsets = [0, 0, 256], sizes = [2, 8, 32], strides = [1, 1, 1]} : vector<2x8x768xbf16> to vector<2x8x32xbf16>
    %9 = vector.extract_strided_slice %6 {offsets = [0, 0, 512], sizes = [2, 8, 32], strides = [1, 1, 1]} : vector<2x8x768xbf16> to vector<2x8x32xbf16>
    %cst_4 = arith.constant dense<0.000000e+00> : vector<2x8x8xf32>
    %10 = tpu.matmul %7, %8, %cst_4 {dimension_numbers = #tpu.dot_dimension_numbers<[2], [2], [1], [1], [0, 0, 0, 1, 1, 1], [0], [0]>} : vector<2x8x32xbf16>, vector<2x8x32xbf16>, vector<2x8x8xf32> -> vector<2x8x8xf32>
    %cst_5 = arith.constant dense<0xFF800000> : vector<2x8xf32>
    %11 = vector.multi_reduction <maximumf>, %10, %cst_5 [2] : vector<2x8x8xf32> to vector<2x8xf32>
    %12 = vector.shape_cast %11 : vector<2x8xf32> to vector<2x8x1xf32>
    %13 = vector.broadcast %12 : vector<2x8x1xf32> to vector<2x8x8xf32>
    %14 = arith.subf %10, %13 : vector<2x8x8xf32>
    %15 = math.exp %14 : vector<2x8x8xf32>
    %cst_6 = arith.constant dense<0.000000e+00> : vector<2x8xf32>
    %16 = vector.multi_reduction <add>, %15, %cst_6 [2] : vector<2x8x8xf32> to vector<2x8xf32>
    %17 = vector.shape_cast %16 : vector<2x8xf32> to vector<2x8x1xf32>
    %18 = tpu.reciprocal %17 : vector<2x8x1xf32> -> vector<2x8x1xf32>
    %19 = vector.broadcast %18 : vector<2x8x1xf32> to vector<2x8x8xf32>
    %20 = arith.mulf %15, %19 : vector<2x8x8xf32>
    %21 = arith.truncf %20 : vector<2x8x8xf32> to vector<2x8x8xbf16>
    %cst_7 = arith.constant dense<0.000000e+00> : vector<2x8x32xf32>
    %22 = tpu.matmul %21, %9, %cst_7 {dimension_numbers = #tpu.dot_dimension_numbers<[2], [1], [1], [2], [0, 0, 0, 1, 1, 2], [0], [0]>} : vector<2x8x8xbf16>, vector<2x8x32xbf16>, vector<2x8x32xf32> -> vector<2x8x32xf32>
    %23 = arith.truncf %22 : vector<2x8x32xf32> to vector<2x8x32xbf16>
    %24 = vector.extract_strided_slice %6 {offsets = [0, 0, 32], sizes = [2, 8, 32], strides = [1, 1, 1]} : vector<2x8x768xbf16> to vector<2x8x32xbf16>
    %25 = vector.extract_strided_slice %6 {offsets = [0, 0, 288], sizes = [2, 8, 32], strides = [1, 1, 1]} : vector<2x8x768xbf16> to vector<2x8x32xbf16>
    %26 = vector.extract_strided_slice %6 {offsets = [0, 0, 544], sizes = [2, 8, 32], strides = [1, 1, 1]} : vector<2x8x768xbf16> to vector<2x8x32xbf16>
    %cst_8 = arith.constant dense<0.000000e+00> : vector<2x8x8xf32>
    %27 = tpu.matmul %24, %25, %cst_8 {dimension_numbers = #tpu.dot_dimension_numbers<[2], [2], [1], [1], [0, 0, 0, 1, 1, 1], [0], [0]>} : vector<2x8x32xbf16>, vector<2x8x32xbf16>, vector<2x8x8xf32> -> vector<2x8x8xf32>
    %cst_9 = arith.constant dense<0xFF800000> : vector<2x8xf32>
    %28 = vector.multi_reduction <maximumf>, %27, %cst_9 [2] : vector<2x8x8xf32> to vector<2x8xf32>
    %29 = vector.shape_cast %28 : vector<2x8xf32> to vector<2x8x1xf32>
    %30 = vector.broadcast %29 : vector<2x8x1xf32> to vector<2x8x8xf32>
    %31 = arith.subf %27, %30 : vector<2x8x8xf32>
    %32 = math.exp %31 : vector<2x8x8xf32>
    %cst_10 = arith.constant dense<0.000000e+00> : vector<2x8xf32>
    %33 = vector.multi_reduction <add>, %32, %cst_10 [2] : vector<2x8x8xf32> to vector<2x8xf32>
    %34 = vector.shape_cast %33 : vector<2x8xf32> to vector<2x8x1xf32>
    %35 = tpu.reciprocal %34 : vector<2x8x1xf32> -> vector<2x8x1xf32>
    %36 = vector.broadcast %35 : vector<2x8x1xf32> to vector<2x8x8xf32>
    %37 = arith.mulf %32, %36 : vector<2x8x8xf32>
    %38 = arith.truncf %37 : vector<2x8x8xf32> to vector<2x8x8xbf16>
    %cst_11 = arith.constant dense<0.000000e+00> : vector<2x8x32xf32>
    %39 = tpu.matmul %38, %26, %cst_11 {dimension_numbers = #tpu.dot_dimension_numbers<[2], [1], [1], [2], [0, 0, 0, 1, 1, 2], [0], [0]>} : vector<2x8x8xbf16>, vector<2x8x32xbf16>, vector<2x8x32xf32> -> vector<2x8x32xf32>
    %40 = arith.truncf %39 : vector<2x8x32xf32> to vector<2x8x32xbf16>
    %41 = vector.extract_strided_slice %6 {offsets = [0, 0, 64], sizes = [2, 8, 32], strides = [1, 1, 1]} : vector<2x8x768xbf16> to vector<2x8x32xbf16>
    %42 = vector.extract_strided_slice %6 {offsets = [0, 0, 320], sizes = [2, 8, 32], strides = [1, 1, 1]} : vector<2x8x768xbf16> to vector<2x8x32xbf16>
    %43 = vector.extract_strided_slice %6 {offsets = [0, 0, 576], sizes = [2, 8, 32], strides = [1, 1, 1]} : vector<2x8x768xbf16> to vector<2x8x32xbf16>
    %cst_12 = arith.constant dense<0.000000e+00> : vector<2x8x8xf32>
    %44 = tpu.matmul %41, %42, %cst_12 {dimension_numbers = #tpu.dot_dimension_numbers<[2], [2], [1], [1], [0, 0, 0, 1, 1, 1], [0], [0]>} : vector<2x8x32xbf16>, vector<2x8x32xbf16>, vector<2x8x8xf32> -> vector<2x8x8xf32>
    %cst_13 = arith.constant dense<0xFF800000> : vector<2x8xf32>
    %45 = vector.multi_reduction <maximumf>, %44, %cst_13 [2] : vector<2x8x8xf32> to vector<2x8xf32>
    %46 = vector.shape_cast %45 : vector<2x8xf32> to vector<2x8x1xf32>
    %47 = vector.broadcast %46 : vector<2x8x1xf32> to vector<2x8x8xf32>
    %48 = arith.subf %44, %47 : vector<2x8x8xf32>
    %49 = math.exp %48 : vector<2x8x8xf32>
    %cst_14 = arith.constant dense<0.000000e+00> : vector<2x8xf32>
    %50 = vector.multi_reduction <add>, %49, %cst_14 [2] : vector<2x8x8xf32> to vector<2x8xf32>
    %51 = vector.shape_cast %50 : vector<2x8xf32> to vector<2x8x1xf32>
    %52 = tpu.reciprocal %51 : vector<2x8x1xf32> -> vector<2x8x1xf32>
    %53 = vector.broadcast %52 : vector<2x8x1xf32> to vector<2x8x8xf32>
    %54 = arith.mulf %49, %53 : vector<2x8x8xf32>
    %55 = arith.truncf %54 : vector<2x8x8xf32> to vector<2x8x8xbf16>
    %cst_15 = arith.constant dense<0.000000e+00> : vector<2x8x32xf32>
    %56 = tpu.matmul %55, %43, %cst_15 {dimension_numbers = #tpu.dot_dimension_numbers<[2], [1], [1], [2], [0, 0, 0, 1, 1, 2], [0], [0]>} : vector<2x8x8xbf16>, vector<2x8x32xbf16>, vector<2x8x32xf32> -> vector<2x8x32xf32>
    %57 = arith.truncf %56 : vector<2x8x32xf32> to vector<2x8x32xbf16>
    %58 = vector.extract_strided_slice %6 {offsets = [0, 0, 96], sizes = [2, 8, 32], strides = [1, 1, 1]} : vector<2x8x768xbf16> to vector<2x8x32xbf16>
    %59 = vector.extract_strided_slice %6 {offsets = [0, 0, 352], sizes = [2, 8, 32], strides = [1, 1, 1]} : vector<2x8x768xbf16> to vector<2x8x32xbf16>
    %60 = vector.extract_strided_slice %6 {offsets = [0, 0, 608], sizes = [2, 8, 32], strides = [1, 1, 1]} : vector<2x8x768xbf16> to vector<2x8x32xbf16>
    %cst_16 = arith.constant dense<0.000000e+00> : vector<2x8x8xf32>
    %61 = tpu.matmul %58, %59, %cst_16 {dimension_numbers = #tpu.dot_dimension_numbers<[2], [2], [1], [1], [0, 0, 0, 1, 1, 1], [0], [0]>} : vector<2x8x32xbf16>, vector<2x8x32xbf16>, vector<2x8x8xf32> -> vector<2x8x8xf32>
    %cst_17 = arith.constant dense<0xFF800000> : vector<2x8xf32>
    %62 = vector.multi_reduction <maximumf>, %61, %cst_17 [2] : vector<2x8x8xf32> to vector<2x8xf32>
    %63 = vector.shape_cast %62 : vector<2x8xf32> to vector<2x8x1xf32>
    %64 = vector.broadcast %63 : vector<2x8x1xf32> to vector<2x8x8xf32>
    %65 = arith.subf %61, %64 : vector<2x8x8xf32>
    %66 = math.exp %65 : vector<2x8x8xf32>
    %cst_18 = arith.constant dense<0.000000e+00> : vector<2x8xf32>
    %67 = vector.multi_reduction <add>, %66, %cst_18 [2] : vector<2x8x8xf32> to vector<2x8xf32>
    %68 = vector.shape_cast %67 : vector<2x8xf32> to vector<2x8x1xf32>
    %69 = tpu.reciprocal %68 : vector<2x8x1xf32> -> vector<2x8x1xf32>
    %70 = vector.broadcast %69 : vector<2x8x1xf32> to vector<2x8x8xf32>
    %71 = arith.mulf %66, %70 : vector<2x8x8xf32>
    %72 = arith.truncf %71 : vector<2x8x8xf32> to vector<2x8x8xbf16>
    %cst_19 = arith.constant dense<0.000000e+00> : vector<2x8x32xf32>
    %73 = tpu.matmul %72, %60, %cst_19 {dimension_numbers = #tpu.dot_dimension_numbers<[2], [1], [1], [2], [0, 0, 0, 1, 1, 2], [0], [0]>} : vector<2x8x8xbf16>, vector<2x8x32xbf16>, vector<2x8x32xf32> -> vector<2x8x32xf32>
    %74 = arith.truncf %73 : vector<2x8x32xf32> to vector<2x8x32xbf16>
    %75 = vector.extract_strided_slice %6 {offsets = [0, 0, 128], sizes = [2, 8, 32], strides = [1, 1, 1]} : vector<2x8x768xbf16> to vector<2x8x32xbf16>
    %76 = vector.extract_strided_slice %6 {offsets = [0, 0, 384], sizes = [2, 8, 32], strides = [1, 1, 1]} : vector<2x8x768xbf16> to vector<2x8x32xbf16>
    %77 = vector.extract_strided_slice %6 {offsets = [0, 0, 640], sizes = [2, 8, 32], strides = [1, 1, 1]} : vector<2x8x768xbf16> to vector<2x8x32xbf16>
    %cst_20 = arith.constant dense<0.000000e+00> : vector<2x8x8xf32>
    %78 = tpu.matmul %75, %76, %cst_20 {dimension_numbers = #tpu.dot_dimension_numbers<[2], [2], [1], [1], [0, 0, 0, 1, 1, 1], [0], [0]>} : vector<2x8x32xbf16>, vector<2x8x32xbf16>, vector<2x8x8xf32> -> vector<2x8x8xf32>
    %cst_21 = arith.constant dense<0xFF800000> : vector<2x8xf32>
    %79 = vector.multi_reduction <maximumf>, %78, %cst_21 [2] : vector<2x8x8xf32> to vector<2x8xf32>
    %80 = vector.shape_cast %79 : vector<2x8xf32> to vector<2x8x1xf32>
    %81 = vector.broadcast %80 : vector<2x8x1xf32> to vector<2x8x8xf32>
    %82 = arith.subf %78, %81 : vector<2x8x8xf32>
    %83 = math.exp %82 : vector<2x8x8xf32>
    %cst_22 = arith.constant dense<0.000000e+00> : vector<2x8xf32>
    %84 = vector.multi_reduction <add>, %83, %cst_22 [2] : vector<2x8x8xf32> to vector<2x8xf32>
    %85 = vector.shape_cast %84 : vector<2x8xf32> to vector<2x8x1xf32>
    %86 = tpu.reciprocal %85 : vector<2x8x1xf32> -> vector<2x8x1xf32>
    %87 = vector.broadcast %86 : vector<2x8x1xf32> to vector<2x8x8xf32>
    %88 = arith.mulf %83, %87 : vector<2x8x8xf32>
    %89 = arith.truncf %88 : vector<2x8x8xf32> to vector<2x8x8xbf16>
    %cst_23 = arith.constant dense<0.000000e+00> : vector<2x8x32xf32>
    %90 = tpu.matmul %89, %77, %cst_23 {dimension_numbers = #tpu.dot_dimension_numbers<[2], [1], [1], [2], [0, 0, 0, 1, 1, 2], [0], [0]>} : vector<2x8x8xbf16>, vector<2x8x32xbf16>, vector<2x8x32xf32> -> vector<2x8x32xf32>
    %91 = arith.truncf %90 : vector<2x8x32xf32> to vector<2x8x32xbf16>
    %92 = vector.extract_strided_slice %6 {offsets = [0, 0, 160], sizes = [2, 8, 32], strides = [1, 1, 1]} : vector<2x8x768xbf16> to vector<2x8x32xbf16>
    %93 = vector.extract_strided_slice %6 {offsets = [0, 0, 416], sizes = [2, 8, 32], strides = [1, 1, 1]} : vector<2x8x768xbf16> to vector<2x8x32xbf16>
    %94 = vector.extract_strided_slice %6 {offsets = [0, 0, 672], sizes = [2, 8, 32], strides = [1, 1, 1]} : vector<2x8x768xbf16> to vector<2x8x32xbf16>
    %cst_24 = arith.constant dense<0.000000e+00> : vector<2x8x8xf32>
    %95 = tpu.matmul %92, %93, %cst_24 {dimension_numbers = #tpu.dot_dimension_numbers<[2], [2], [1], [1], [0, 0, 0, 1, 1, 1], [0], [0]>} : vector<2x8x32xbf16>, vector<2x8x32xbf16>, vector<2x8x8xf32> -> vector<2x8x8xf32>
    %cst_25 = arith.constant dense<0xFF800000> : vector<2x8xf32>
    %96 = vector.multi_reduction <maximumf>, %95, %cst_25 [2] : vector<2x8x8xf32> to vector<2x8xf32>
    %97 = vector.shape_cast %96 : vector<2x8xf32> to vector<2x8x1xf32>
    %98 = vector.broadcast %97 : vector<2x8x1xf32> to vector<2x8x8xf32>
    %99 = arith.subf %95, %98 : vector<2x8x8xf32>
    %100 = math.exp %99 : vector<2x8x8xf32>
    %cst_26 = arith.constant dense<0.000000e+00> : vector<2x8xf32>
    %101 = vector.multi_reduction <add>, %100, %cst_26 [2] : vector<2x8x8xf32> to vector<2x8xf32>
    %102 = vector.shape_cast %101 : vector<2x8xf32> to vector<2x8x1xf32>
    %103 = tpu.reciprocal %102 : vector<2x8x1xf32> -> vector<2x8x1xf32>
    %104 = vector.broadcast %103 : vector<2x8x1xf32> to vector<2x8x8xf32>
    %105 = arith.mulf %100, %104 : vector<2x8x8xf32>
    %106 = arith.truncf %105 : vector<2x8x8xf32> to vector<2x8x8xbf16>
    %cst_27 = arith.constant dense<0.000000e+00> : vector<2x8x32xf32>
    %107 = tpu.matmul %106, %94, %cst_27 {dimension_numbers = #tpu.dot_dimension_numbers<[2], [1], [1], [2], [0, 0, 0, 1, 1, 2], [0], [0]>} : vector<2x8x8xbf16>, vector<2x8x32xbf16>, vector<2x8x32xf32> -> vector<2x8x32xf32>
    %108 = arith.truncf %107 : vector<2x8x32xf32> to vector<2x8x32xbf16>
    %109 = vector.extract_strided_slice %6 {offsets = [0, 0, 192], sizes = [2, 8, 32], strides = [1, 1, 1]} : vector<2x8x768xbf16> to vector<2x8x32xbf16>
    %110 = vector.extract_strided_slice %6 {offsets = [0, 0, 448], sizes = [2, 8, 32], strides = [1, 1, 1]} : vector<2x8x768xbf16> to vector<2x8x32xbf16>
    %111 = vector.extract_strided_slice %6 {offsets = [0, 0, 704], sizes = [2, 8, 32], strides = [1, 1, 1]} : vector<2x8x768xbf16> to vector<2x8x32xbf16>
    %cst_28 = arith.constant dense<0.000000e+00> : vector<2x8x8xf32>
    %112 = tpu.matmul %109, %110, %cst_28 {dimension_numbers = #tpu.dot_dimension_numbers<[2], [2], [1], [1], [0, 0, 0, 1, 1, 1], [0], [0]>} : vector<2x8x32xbf16>, vector<2x8x32xbf16>, vector<2x8x8xf32> -> vector<2x8x8xf32>
    %cst_29 = arith.constant dense<0xFF800000> : vector<2x8xf32>
    %113 = vector.multi_reduction <maximumf>, %112, %cst_29 [2] : vector<2x8x8xf32> to vector<2x8xf32>
    %114 = vector.shape_cast %113 : vector<2x8xf32> to vector<2x8x1xf32>
    %115 = vector.broadcast %114 : vector<2x8x1xf32> to vector<2x8x8xf32>
    %116 = arith.subf %112, %115 : vector<2x8x8xf32>
    %117 = math.exp %116 : vector<2x8x8xf32>
    %cst_30 = arith.constant dense<0.000000e+00> : vector<2x8xf32>
    %118 = vector.multi_reduction <add>, %117, %cst_30 [2] : vector<2x8x8xf32> to vector<2x8xf32>
    %119 = vector.shape_cast %118 : vector<2x8xf32> to vector<2x8x1xf32>
    %120 = tpu.reciprocal %119 : vector<2x8x1xf32> -> vector<2x8x1xf32>
    %121 = vector.broadcast %120 : vector<2x8x1xf32> to vector<2x8x8xf32>
    %122 = arith.mulf %117, %121 : vector<2x8x8xf32>
    %123 = arith.truncf %122 : vector<2x8x8xf32> to vector<2x8x8xbf16>
    %cst_31 = arith.constant dense<0.000000e+00> : vector<2x8x32xf32>
    %124 = tpu.matmul %123, %111, %cst_31 {dimension_numbers = #tpu.dot_dimension_numbers<[2], [1], [1], [2], [0, 0, 0, 1, 1, 2], [0], [0]>} : vector<2x8x8xbf16>, vector<2x8x32xbf16>, vector<2x8x32xf32> -> vector<2x8x32xf32>
    %125 = arith.truncf %124 : vector<2x8x32xf32> to vector<2x8x32xbf16>
    %126 = vector.extract_strided_slice %6 {offsets = [0, 0, 224], sizes = [2, 8, 32], strides = [1, 1, 1]} : vector<2x8x768xbf16> to vector<2x8x32xbf16>
    %127 = vector.extract_strided_slice %6 {offsets = [0, 0, 480], sizes = [2, 8, 32], strides = [1, 1, 1]} : vector<2x8x768xbf16> to vector<2x8x32xbf16>
    %128 = vector.extract_strided_slice %6 {offsets = [0, 0, 736], sizes = [2, 8, 32], strides = [1, 1, 1]} : vector<2x8x768xbf16> to vector<2x8x32xbf16>
    %cst_32 = arith.constant dense<0.000000e+00> : vector<2x8x8xf32>
    %129 = tpu.matmul %126, %127, %cst_32 {dimension_numbers = #tpu.dot_dimension_numbers<[2], [2], [1], [1], [0, 0, 0, 1, 1, 1], [0], [0]>} : vector<2x8x32xbf16>, vector<2x8x32xbf16>, vector<2x8x8xf32> -> vector<2x8x8xf32>
    %cst_33 = arith.constant dense<0xFF800000> : vector<2x8xf32>
    %130 = vector.multi_reduction <maximumf>, %129, %cst_33 [2] : vector<2x8x8xf32> to vector<2x8xf32>
    %131 = vector.shape_cast %130 : vector<2x8xf32> to vector<2x8x1xf32>
    %132 = vector.broadcast %131 : vector<2x8x1xf32> to vector<2x8x8xf32>
    %133 = arith.subf %129, %132 : vector<2x8x8xf32>
    %134 = math.exp %133 : vector<2x8x8xf32>
    %cst_34 = arith.constant dense<0.000000e+00> : vector<2x8xf32>
    %135 = vector.multi_reduction <add>, %134, %cst_34 [2] : vector<2x8x8xf32> to vector<2x8xf32>
    %136 = vector.shape_cast %135 : vector<2x8xf32> to vector<2x8x1xf32>
    %137 = tpu.reciprocal %136 : vector<2x8x1xf32> -> vector<2x8x1xf32>
    %138 = vector.broadcast %137 : vector<2x8x1xf32> to vector<2x8x8xf32>
    %139 = arith.mulf %134, %138 : vector<2x8x8xf32>
    %140 = arith.truncf %139 : vector<2x8x8xf32> to vector<2x8x8xbf16>
    %cst_35 = arith.constant dense<0.000000e+00> : vector<2x8x32xf32>
    %141 = tpu.matmul %140, %128, %cst_35 {dimension_numbers = #tpu.dot_dimension_numbers<[2], [1], [1], [2], [0, 0, 0, 1, 1, 2], [0], [0]>} : vector<2x8x8xbf16>, vector<2x8x32xbf16>, vector<2x8x32xf32> -> vector<2x8x32xf32>
    %142 = arith.truncf %141 : vector<2x8x32xf32> to vector<2x8x32xbf16>
    %143 = tpu.concatenate %23, %40, %57, %74, %91, %108, %125, %142 in 2 : vector<2x8x32xbf16>, vector<2x8x32xbf16>, vector<2x8x32xbf16>, vector<2x8x32xbf16>, vector<2x8x32xbf16>, vector<2x8x32xbf16>, vector<2x8x32xbf16>, vector<2x8x32xbf16> -> vector<2x8x256xbf16>
    %144 = vector.shape_cast %143 : vector<2x8x256xbf16> to vector<16x256xbf16>
    %c0_36 = arith.constant 0 : index
    %c0_37 = arith.constant 0 : index
    %145 = vector.load %arg3[%c0_36, %c0_37] : memref<256x32xbf16, #tpu.memory_space<vmem>>, vector<256x32xbf16>
    %cst_38 = arith.constant dense<0.000000e+00> : vector<16x32xf32>
    %146 = tpu.matmul %144, %145, %cst_38 {dimension_numbers = #tpu.dot_dimension_numbers<[1], [0], [0], [1], [0, 0, 1, 1], [], []>} : vector<16x256xbf16>, vector<256x32xbf16>, vector<16x32xf32> -> vector<16x32xf32>
    %c0_39 = arith.constant 0 : index
    %c0_40 = arith.constant 0 : index
    %147 = vector.load %arg4[%c0_39, %c0_40] : memref<1x32xf32, #tpu.memory_space<vmem>>, vector<1x32xf32>
    %148 = vector.broadcast %147 : vector<1x32xf32> to vector<16x32xf32>
    %149 = arith.addf %146, %148 : vector<16x32xf32>
    %150 = vector.shape_cast %149 : vector<16x32xf32> to vector<2x8x32xf32>
    %c0_41 = arith.constant 0 : index
    %c0_42 = arith.constant 0 : index
    %c0_43 = arith.constant 0 : index
    %151 = vector.load %arg5[%c0_41, %c0_42, %c0_43] : memref<2x8x32xf32, #tpu.memory_space<vmem>>, vector<2x8x32xf32>
    tpu.vector_store %arg5[%c0_41, %c0_42, %c0_43], %150 {strides = array<i32>} : memref<2x8x32xf32, #tpu.memory_space<vmem>>, vector<2x8x32xf32>,
    return
  }
  func.func @transform_0(%arg0: i32) -> (i32, i32, i32) {
    %c0_i32 = arith.constant 0 : i32
    %c0_i32_0 = arith.constant 0 : i32
    %c0_i32_1 = arith.constant 0 : i32
    return %arg0, %c0_i32, %c0_i32_0 : i32, i32, i32
  }
  func.func @transform_1(%arg0: i32) -> (i32, i32) {
    %c0_i32 = arith.constant 0 : i32
    %c0_i32_0 = arith.constant 0 : i32
    %c0_i32_1 = arith.constant 0 : i32
    return %c0_i32, %c0_i32_0 : i32, i32
  }
  func.func @transform_2(%arg0: i32) -> (i32, i32) {
    %c0_i32 = arith.constant 0 : i32
    %c0_i32_0 = arith.constant 0 : i32
    %c0_i32_1 = arith.constant 0 : i32
    return %c0_i32, %c0_i32_0 : i32, i32
  }
  func.func @transform_3(%arg0: i32) -> (i32, i32) {
    %c0_i32 = arith.constant 0 : i32
    %c0_i32_0 = arith.constant 0 : i32
    %c0_i32_1 = arith.constant 0 : i32
    return %c0_i32, %c0_i32_0 : i32, i32
  }
  func.func @transform_4(%arg0: i32) -> (i32, i32, i32) {
    %c0_i32 = arith.constant 0 : i32
    %c0_i32_0 = arith.constant 0 : i32
    %c0_i32_1 = arith.constant 0 : i32
    return %arg0, %c0_i32, %c0_i32_0 : i32, i32, i32
  }
}

</mosaic_0001>

<llo_original>
// kernel: tpu_custom_call.1
$region0: #{tpu_custom_call.1}
  #allocation0 [shape = 'u32[]', space=smem, size = 0x4, offset = 0x4, fixed_abs, tag = 'smem constant byte address 0x4 - core index']
  #allocation1 [shape = 'u32[144,128]{1,0:T(1,128)}', space=vmem, size = 0x12000, scoped, tag = 'internal scratch']
  %s0 = inlined_call_operand.vmem [shape: f32[2,8,32], index: 0, kind: input, shape index: {}]
  %s1 = inlined_call_operand.vmem [shape: bf16[32,768], index: 1, kind: input, shape index: {}]
  %s2 = inlined_call_operand.vmem [shape: bf16[256,32], index: 2, kind: input, shape index: {}]
  %s3 = inlined_call_operand.vmem [shape: f32[1,32], index: 3, kind: input, shape index: {}]
  %s4 = inlined_call_operand.hbm [shape: f32[2,8,32], index: 4, kind: output, shape index: {}]
  %s5 = sld [smem:[#allocation0]]
  $region26: #{tpu_custom_call.1} parent=0
    _
  %s7 = ssub.s32 1, %s5
  %s8 = scalar_select 0, %s7, %s5
  $region1: #{tpu_custom_call.1} parent=0
    #allocation2 [shape = 'u8[8192]{0}', space=vmem, size = 0x2000, scoped, tag = 'output window, operand 0, single buffered']
    #allocation3 [shape = 's32[1]{0}', space=sflag, size = 0x4, scoped, tag = 'scoped memory for tpu_custom_call.1']
    %9 = vsyncpa [#allocation3], 0
    // Predicated region
    $region2: #{tpu_custom_call.1} parent=1 // pred_check
      _
    $region3: #{tpu_custom_call.1} parent=1 // pred_check_branch
      %11 = sbr.rel (0) target = $region5
    $region4: #{tpu_custom_call.1} parent=1 // pred_region
      _
    $region5: #{tpu_custom_call.1} parent=1 // pred_fallthru
      _
    // Predicated region
    $region6: #{tpu_custom_call.1} parent=1 // pred_check
      _
    $region7: #{tpu_custom_call.1} parent=1 // pred_check_branch
      %13 = sbr.rel (0) target = $region9
    $region8: #{tpu_custom_call.1} parent=1 // pred_region
      _
    $region9: #{tpu_custom_call.1} parent=1 // pred_fallthru
      _
    // Predicated region
    $region10: #{tpu_custom_call.1} parent=1 // pred_check
      _
    $region11: #{tpu_custom_call.1} parent=1 // pred_check_branch
      %15 = sbr.rel (0) target = $region13
    $region12: #{tpu_custom_call.1} parent=1 // pred_region
      _
    $region13: #{tpu_custom_call.1} parent=1 // pred_fallthru
      _
    // Predicated region
    $region14: #{tpu_custom_call.1} parent=1 // pred_check
      _
    $region15: #{tpu_custom_call.1} parent=1 // pred_check_branch
      %17 = sbr.rel (0) target = $region17
    $region16: #{tpu_custom_call.1} parent=1 // pred_region
      _
    $region17: #{tpu_custom_call.1} parent=1 // pred_fallthru
      _
    %v19 = vld [vmem:[%s0] sm:$0xff]
    %v20 = vld [vmem:[%s0 + $0x8] sm:$0xff]
    %v21 = vpack.c.bf16 %v20, %v19
    %v22 = vld [vmem:[%s1] sm:$0xff]
    %v23 = vld [vmem:[%s1 + $0x8] sm:$0xff]
    %v24 = vld [vmem:[%s1 + $0x10] sm:$0xff]
    %v25 = vld [vmem:[%s1 + $0x18] sm:$0xff]
    %v26 = vld [vmem:[%s1 + $0x20] sm:$0xff]
    %v27 = vld [vmem:[%s1 + $0x28] sm:$0xff]
    %v28 = vld [vmem:[%s1 + $0x30] sm:$0xff]
    %v29 = vld [vmem:[%s1 + $0x38] sm:$0xff]
    %v30 = vld [vmem:[%s1 + $0x40] sm:$0xff]
    %v31 = vld [vmem:[%s1 + $0x48] sm:$0xff]
    %v32 = vld [vmem:[%s1 + $0x50] sm:$0xff]
    %v33 = vld [vmem:[%s1 + $0x58] sm:$0xff]
    %v46 = vunpack.c.l.b16 %v22
    %v47 = vunpack.c.h.b16 %v22
    %v48 = vunpack.c.l.b16 %v23
    %v49 = vunpack.c.h.b16 %v23
    %v50 = vunpack.c.l.b16 %v24
    %v51 = vunpack.c.h.b16 %v24
    %v52 = vunpack.c.l.b16 %v25
    %v53 = vunpack.c.h.b16 %v25
    %v54 = vunpack.c.l.b16 %v26
    %v55 = vunpack.c.h.b16 %v26
    %v56 = vunpack.c.l.b16 %v27
    %v57 = vunpack.c.h.b16 %v27
    %v58 = vunpack.c.l.b16 %v28
    %v59 = vunpack.c.h.b16 %v28
    %v60 = vunpack.c.l.b16 %v29
    %v61 = vunpack.c.h.b16 %v29
    %v62 = vunpack.c.l.b16 %v30
    %v63 = vunpack.c.h.b16 %v30
    %v64 = vunpack.c.l.b16 %v31
    %v65 = vunpack.c.h.b16 %v31
    %v66 = vunpack.c.l.b16 %v32
    %v67 = vunpack.c.h.b16 %v32
    %v68 = vunpack.c.l.b16 %v33
    %v69 = vunpack.c.h.b16 %v33
    %v70 = vpack.c.b16 %v52, %v46
    %v71 = vpack.c.b16 %v53, %v47
    %v72 = vpack.c.b16 %v54, %v48
    %v73 = vpack.c.b16 %v55, %v49
    %v74 = vpack.c.b16 %v56, %v50
    %v75 = vpack.c.b16 %v57, %v51
    %v76 = vpack.c.b16 %v64, %v58
    %v77 = vpack.c.b16 %v65, %v59
    %v78 = vpack.c.b16 %v66, %v60
    %v79 = vpack.c.b16 %v67, %v61
    %v80 = vpack.c.b16 %v68, %v62
    %v81 = vpack.c.b16 %v69, %v63
    %vm94 = vcmask 261120
    %v96 = vsel %vm94, %v21, 0
    %98 = vmatprep.subr.bf16.mxu0 0
    %99 = vmatpush1.bf16.msra.mxu0 0
    %100 = vmatprep.subr.bf16.mxu0 0
    %101 = vmatpush1.bf16.msra.mxu0 0
    %102 = vmatprep.subr.bf16.mxu0 0
    %103 = vmatpush1.bf16.msra.mxu0 0
    %104 = vmatprep.subr.bf16.mxu0 0
    %105 = vmatpush1.bf16.msra.mxu0 0
    %106 = vmatprep.subr.bf16.mxu0 0
    %107 = vmatpush1.bf16.msra.mxu0 0
    %108 = vmatprep.subr.bf16.mxu0 0
    %109 = vmatpush1.bf16.msra.mxu0 0
    %110 = vmatprep.subr.bf16.mxu0 %v77
    %111 = vmatpush1.bf16.msra.mxu0 %v76
    %112 = vmatprep.subr.bf16.mxu0 %v71
    %113 = vmatpush1.bf16.msra.mxu0 %v70
    %114 = vmatprep.subr.bf16.mxu0 0
    %115 = vmatpush2.bf16.msra.mxu0 0
    %116 = vmatprep.subr.bf16.mxu0 0
    %117 = vmatpush2.bf16.msra.mxu0 0
    %118 = vmatprep.subr.bf16.mxu0 0
    %119 = vmatpush2.bf16.msra.mxu0 0
    %120 = vmatprep.subr.bf16.mxu0 0
    %121 = vmatpush2.bf16.msra.mxu0 0
    %122 = vmatprep.subr.bf16.mxu0 0
    %123 = vmatpush2.bf16.msra.mxu0 0
    %124 = vmatprep.subr.bf16.mxu0 0
    %125 = vmatpush2.bf16.msra.mxu0 0
    %126 = vmatprep.subr.bf16.mxu0 0
    %127 = vmatpush2.bf16.msra.mxu0 0
    %128 = vmatprep.subr.bf16.mxu0 0
    %129 = vmatpush2.bf16.msra.mxu0 0
    %130 = vmatprep.mubr.bf16.mxu0 0
    %131 = vmatmul.mubr.bf16.gmra.mxu0 %v96
    %v132 = vpop.f32.mrf.mxu0
    %v133 = vadd.f32 0.0, %v132
    %v134 = vpop.f32.mrf.mxu0
    %v135 = vadd.f32 0.0, %v134
    %v136 = vpop.f32.mrf.mxu0
    %v137 = vadd.f32 0.0, %v136
    %v138 = vpop.f32.mrf.mxu0
    %v139 = vadd.f32 0.0, %v138
    %140 = vdwg.mxu0
    %141 = vmatprep.subr.bf16.mxu0 0
    %142 = vmatpush1.bf16.msra.mxu0 0
    %143 = vmatprep.subr.bf16.mxu0 0
    %144 = vmatpush1.bf16.msra.mxu0 0
    %145 = vmatprep.subr.bf16.mxu0 0
    %146 = vmatpush1.bf16.msra.mxu0 0
    %147 = vmatprep.subr.bf16.mxu0 0
    %148 = vmatpush1.bf16.msra.mxu0 0
    %149 = vmatprep.subr.bf16.mxu0 0
    %150 = vmatpush1.bf16.msra.mxu0 0
    %151 = vmatprep.subr.bf16.mxu0 0
    %152 = vmatpush1.bf16.msra.mxu0 0
    %153 = vmatprep.subr.bf16.mxu0 %v79
    %154 = vmatpush1.bf16.msra.mxu0 %v78
    %155 = vmatprep.subr.bf16.mxu0 %v73
    %156 = vmatpush1.bf16.msra.mxu0 %v72
    %157 = vmatprep.subr.bf16.mxu0 0
    %158 = vmatpush2.bf16.msra.mxu0 0
    %159 = vmatprep.subr.bf16.mxu0 0
    %160 = vmatpush2.bf16.msra.mxu0 0
    %161 = vmatprep.subr.bf16.mxu0 0
    %162 = vmatpush2.bf16.msra.mxu0 0
    %163 = vmatprep.subr.bf16.mxu0 0
    %164 = vmatpush2.bf16.msra.mxu0 0
    %165 = vmatprep.subr.bf16.mxu0 0
    %166 = vmatpush2.bf16.msra.mxu0 0
    %167 = vmatprep.subr.bf16.mxu0 0
    %168 = vmatpush2.bf16.msra.mxu0 0
    %169 = vmatprep.subr.bf16.mxu0 0
    %170 = vmatpush2.bf16.msra.mxu0 0
    %171 = vmatprep.subr.bf16.mxu0 0
    %172 = vmatpush2.bf16.msra.mxu0 0
    %173 = vmatprep.mubr.bf16.mxu0 0
    %174 = vmatmul.mubr.bf16.gmra.mxu0 %v96
    %v175 = vpop.f32.mrf.mxu0
    %v176 = vadd.f32 0.0, %v175
    %v177 = vpop.f32.mrf.mxu0
    %v178 = vadd.f32 0.0, %v177
    %v179 = vpop.f32.mrf.mxu0
    %v180 = vadd.f32 0.0, %v179
    %v181 = vpop.f32.mrf.mxu0
    %v182 = vadd.f32 0.0, %v181
    %183 = vdwg.mxu0
    %184 = vmatprep.subr.bf16.mxu0 0
    %185 = vmatpush1.bf16.msra.mxu0 0
    %186 = vmatprep.subr.bf16.mxu0 0
    %187 = vmatpush1.bf16.msra.mxu0 0
    %188 = vmatprep.subr.bf16.mxu0 0
    %189 = vmatpush1.bf16.msra.mxu0 0
    %190 = vmatprep.subr.bf16.mxu0 0
    %191 = vmatpush1.bf16.msra.mxu0 0
    %192 = vmatprep.subr.bf16.mxu0 0
    %193 = vmatpush1.bf16.msra.mxu0 0
    %194 = vmatprep.subr.bf16.mxu0 0
    %195 = vmatpush1.bf16.msra.mxu0 0
    %196 = vmatprep.subr.bf16.mxu0 %v81
    %197 = vmatpush1.bf16.msra.mxu0 %v80
    %198 = vmatprep.subr.bf16.mxu0 %v75
    %199 = vmatpush1.bf16.msra.mxu0 %v74
    %200 = vmatprep.subr.bf16.mxu0 0
    %201 = vmatpush2.bf16.msra.mxu0 0
    %202 = vmatprep.subr.bf16.mxu0 0
    %203 = vmatpush2.bf16.msra.mxu0 0
    %204 = vmatprep.subr.bf16.mxu0 0
    %205 = vmatpush2.bf16.msra.mxu0 0
    %206 = vmatprep.subr.bf16.mxu0 0
    %207 = vmatpush2.bf16.msra.mxu0 0
    %208 = vmatprep.subr.bf16.mxu0 0
    %209 = vmatpush2.bf16.msra.mxu0 0
    %210 = vmatprep.subr.bf16.mxu0 0
    %211 = vmatpush2.bf16.msra.mxu0 0
    %212 = vmatprep.subr.bf16.mxu0 0
    %213 = vmatpush2.bf16.msra.mxu0 0
    %214 = vmatprep.subr.bf16.mxu0 0
    %215 = vmatpush2.bf16.msra.mxu0 0
    %216 = vmatprep.mubr.bf16.mxu0 0
    %217 = vmatmul.mubr.bf16.gmra.mxu0 %v96
    %v218 = vpop.f32.mrf.mxu0
    %v219 = vadd.f32 0.0, %v218
    %v220 = vpop.f32.mrf.mxu0
    %v221 = vadd.f32 0.0, %v220
    %v222 = vpop.f32.mrf.mxu0
    %v223 = vadd.f32 0.0, %v222
    %v224 = vpop.f32.mrf.mxu0
    %v225 = vadd.f32 0.0, %v224
    %226 = vdwg.mxu0
    %v227 = vpack.c.bf16 %v137, %v133
    %v228 = vpack.c.bf16 %v139, %v135
    %v229 = vpack.c.bf16 %v180, %v176
    %v230 = vpack.c.bf16 %v182, %v178
    %v231 = vpack.c.bf16 %v223, %v219
    %v232 = vpack.c.bf16 %v225, %v221
    %v239 = vunpack.c.l.b16 %v227
    %v240 = vunpack.c.l.b16 %v228
    %v241 = vunpack.c.l.b16 %v229
    %v242 = vunpack.c.l.b16 %v230
    %v243 = vunpack.c.l.b16 %v231
    %v244 = vunpack.c.l.b16 %v232
    %v245 = vunpack.c.h.b16 %v227
    %v246 = vunpack.c.h.b16 %v228
    %v247 = vunpack.c.h.b16 %v229
    %v248 = vunpack.c.h.b16 %v230
    %v249 = vunpack.c.h.b16 %v231
    %v250 = vunpack.c.h.b16 %v232
    %v251 = vpack.c.b16 %v240, %v239
    %v252 = vpack.c.b16 %v242, %v241
    %v253 = vpack.c.b16 %v244, %v243
    %v254 = vpack.c.b16 %v246, %v245
    %v255 = vpack.c.b16 %v248, %v247
    %v256 = vpack.c.b16 %v250, %v249
    %v258 = vsel %vm94, %v251, 0
    %v261 = vsel %vm94, %v252, 0
    %263 = vmatprep.subr.bf16.mxu0 0
    %264 = vmatpush1.bf16.xpose.msra.mxu0 0
    %265 = vmatprep.subr.bf16.mxu0 0
    %266 = vmatpush1.bf16.xpose.msra.mxu0 0
    %267 = vmatprep.subr.bf16.mxu0 0
    %268 = vmatpush1.bf16.xpose.msra.mxu0 0
    %269 = vmatprep.subr.bf16.mxu0 0
    %270 = vmatpush1.bf16.xpose.msra.mxu0 0
    %271 = vmatprep.subr.bf16.mxu0 0
    %272 = vmatpush1.bf16.xpose.msra.mxu0 0
    %273 = vmatprep.subr.bf16.mxu0 0
    %274 = vmatpush1.bf16.xpose.msra.mxu0 0
    %275 = vmatprep.subr.bf16.mxu0 0
    %276 = vmatpush1.bf16.xpose.msra.mxu0 0
    %277 = vmatprep.subr.bf16.mxu0 0
    %278 = vmatpush1.bf16.xpose.msra.mxu0 %v261
    %279 = vmatprep.subr.bf16.mxu0 0
    %280 = vmatpush2.bf16.xpose.msra.mxu0 0
    %281 = vmatprep.subr.bf16.mxu0 0
    %282 = vmatpush2.bf16.xpose.msra.mxu0 0
    %283 = vmatprep.subr.bf16.mxu0 0
    %284 = vmatpush2.bf16.xpose.msra.mxu0 0
    %285 = vmatprep.subr.bf16.mxu0 0
    %286 = vmatpush2.bf16.xpose.msra.mxu0 0
    %287 = vmatprep.subr.bf16.mxu0 0
    %288 = vmatpush2.bf16.xpose.msra.mxu0 0
    %289 = vmatprep.subr.bf16.mxu0 0
    %290 = vmatpush2.bf16.xpose.msra.mxu0 0
    %291 = vmatprep.subr.bf16.mxu0 0
    %292 = vmatpush2.bf16.xpose.msra.mxu0 0
    %293 = vmatprep.subr.bf16.mxu0 0
    %294 = vmatpush2.bf16.xpose.msra.mxu0 0
    %295 = vmatprep.mubr.bf16.mxu0 0
    %296 = vmatmul.mubr.bf16.gmra.mxu0 %v258
    %v297 = vpop.f32.mrf.mxu0
    %v298 = vadd.f32 0.0, %v297
    %v299 = vpop.f32.mrf.mxu0
    %v300 = vpop.f32.mrf.mxu0
    %v301 = vpop.f32.mrf.mxu0
    %302 = vdwg.mxu0
    %v304 = vsel %vm94, %v254, 0
    %v307 = vsel %vm94, %v255, 0
    %309 = vmatprep.subr.bf16.mxu0 0
    %310 = vmatpush1.bf16.xpose.msra.mxu0 0
    %311 = vmatprep.subr.bf16.mxu0 0
    %312 = vmatpush1.bf16.xpose.msra.mxu0 0
    %313 = vmatprep.subr.bf16.mxu0 0
    %314 = vmatpush1.bf16.xpose.msra.mxu0 0
    %315 = vmatprep.subr.bf16.mxu0 0
    %316 = vmatpush1.bf16.xpose.msra.mxu0 0
    %317 = vmatprep.subr.bf16.mxu0 0
    %318 = vmatpush1.bf16.xpose.msra.mxu0 0
    %319 = vmatprep.subr.bf16.mxu0 0
    %320 = vmatpush1.bf16.xpose.msra.mxu0 0
    %321 = vmatprep.subr.bf16.mxu0 0
    %322 = vmatpush1.bf16.xpose.msra.mxu0 0
    %323 = vmatprep.subr.bf16.mxu0 0
    %324 = vmatpush1.bf16.xpose.msra.mxu0 %v307
    %325 = vmatprep.subr.bf16.mxu0 0
    %326 = vmatpush2.bf16.xpose.msra.mxu0 0
    %327 = vmatprep.subr.bf16.mxu0 0
    %328 = vmatpush2.bf16.xpose.msra.mxu0 0
    %329 = vmatprep.subr.bf16.mxu0 0
    %330 = vmatpush2.bf16.xpose.msra.mxu0 0
    %331 = vmatprep.subr.bf16.mxu0 0
    %332 = vmatpush2.bf16.xpose.msra.mxu0 0
    %333 = vmatprep.subr.bf16.mxu0 0
    %334 = vmatpush2.bf16.xpose.msra.mxu0 0
    %335 = vmatprep.subr.bf16.mxu0 0
    %336 = vmatpush2.bf16.xpose.msra.mxu0 0
    %337 = vmatprep.subr.bf16.mxu0 0
    %338 = vmatpush2.bf16.xpose.msra.mxu0 0
    %339 = vmatprep.subr.bf16.mxu0 0
    %340 = vmatpush2.bf16.xpose.msra.mxu0 0
    %341 = vmatprep.mubr.bf16.mxu0 0
    %342 = vmatmul.mubr.bf16.gmra.mxu0 %v304
    %v343 = vpop.f32.mrf.mxu0
    %v344 = vadd.f32 0.0, %v343
    %v345 = vpop.f32.mrf.mxu0
    %v346 = vpop.f32.mrf.mxu0
    %v347 = vpop.f32.mrf.mxu0
    %348 = vdwg.mxu0
    %vm349 = vcmask 64512
    %v350 = vsel %vm349, %v298, -inf
    %351 = vmax.xlane.f32.xlu0 %v350
    %v352 = vpop.xlane.xlu0 %351
    %v353 = vsel %vm349, %v344, -inf
    %354 = vmax.xlane.f32.xlu0 %v353
    %v355 = vpop.xlane.xlu0 %354
    %v356 = vsub.f32 %v298, %v352
    %v357 = vsub.f32 %v344, %v355
    %v358 = vmul.f32 %v356, 1.442695
    %v359 = vpow.pop %v358
    %v360 = vmul.f32 %v357, 1.442695
    %v361 = vpow.pop %v360
    %v362 = vsel %vm349, %v359, 0.0
    %363 = vadd.xlane.f32.xlu0 %v362
    %v364 = vpop.xlane.xlu0 %363
    %v365 = vsel %vm349, %v361, 0.0
    %366 = vadd.xlane.f32.xlu0 %v365
    %v367 = vpop.xlane.xlu0 %366
    %v368 = vrcp.pop %v364
    %v369 = vrcp.pop %v367
    %v370 = vmul.f32 %v359, %v368
    %v371 = vmul.f32 %v361, %v369
    %v372 = vpack.c.bf16 %v370, %v370
    %v373 = vpack.c.bf16 %v371, %v371
    %v375 = vsel %vm349, %v372, 0
    %vm377 = vcmask 1043456
    %v379 = vsel %vm377, %v253, 0
    %381 = vmatprep.subr.bf16.mxu0 0
    %382 = vmatpush1.bf16.msra.mxu0 0
    %383 = vmatprep.subr.bf16.mxu0 0
    %384 = vmatpush1.bf16.msra.mxu0 0
    %385 = vmatprep.subr.bf16.mxu0 0
    %386 = vmatpush1.bf16.msra.mxu0 0
    %387 = vmatprep.subr.bf16.mxu0 0
    %388 = vmatpush1.bf16.msra.mxu0 0
    %389 = vmatprep.subr.bf16.mxu0 0
    %390 = vmatpush1.bf16.msra.mxu0 0
    %391 = vmatprep.subr.bf16.mxu0 0
    %392 = vmatpush1.bf16.msra.mxu0 0
    %393 = vmatprep.subr.bf16.mxu0 0
    %394 = vmatpush1.bf16.msra.mxu0 0
    %395 = vmatprep.subr.bf16.mxu0 0
    %396 = vmatpush1.bf16.msra.mxu0 %v379
    %397 = vmatprep.subr.bf16.mxu0 0
    %398 = vmatpush2.bf16.msra.mxu0 0
    %399 = vmatprep.subr.bf16.mxu0 0
    %400 = vmatpush2.bf16.msra.mxu0 0
    %401 = vmatprep.subr.bf16.mxu0 0
    %402 = vmatpush2.bf16.msra.mxu0 0
    %403 = vmatprep.subr.bf16.mxu0 0
    %404 = vmatpush2.bf16.msra.mxu0 0
    %405 = vmatprep.subr.bf16.mxu0 0
    %406 = vmatpush2.bf16.msra.mxu0 0
    %407 = vmatprep.subr.bf16.mxu0 0
    %408 = vmatpush2.bf16.msra.mxu0 0
    %409 = vmatprep.subr.bf16.mxu0 0
    %410 = vmatpush2.bf16.msra.mxu0 0
    %411 = vmatprep.subr.bf16.mxu0 0
    %412 = vmatpush2.bf16.msra.mxu0 0
    %413 = vmatprep.mubr.bf16.mxu0 0
    %414 = vmatmul.mubr.bf16.gmra.mxu0 %v375
    %v415 = vpop.f32.mrf.mxu0
    %v416 = vadd.f32 0.0, %v415
    %v417 = vpop.f32.mrf.mxu0
    %v418 = vpop.f32.mrf.mxu0
    %v419 = vpop.f32.mrf.mxu0
    %420 = vdwg.mxu0
    %v422 = vsel %vm349, %v373, 0
    %v425 = vsel %vm377, %v256, 0
    %427 = vmatprep.subr.bf16.mxu0 0
    %428 = vmatpush1.bf16.msra.mxu0 0
    %429 = vmatprep.subr.bf16.mxu0 0
    %430 = vmatpush1.bf16.msra.mxu0 0
    %431 = vmatprep.subr.bf16.mxu0 0
    %432 = vmatpush1.bf16.msra.mxu0 0
    %433 = vmatprep.subr.bf16.mxu0 0
    %434 = vmatpush1.bf16.msra.mxu0 0
    %435 = vmatprep.subr.bf16.mxu0 0
    %436 = vmatpush1.bf16.msra.mxu0 0
    %437 = vmatprep.subr.bf16.mxu0 0
    %438 = vmatpush1.bf16.msra.mxu0 0
    %439 = vmatprep.subr.bf16.mxu0 0
    %440 = vmatpush1.bf16.msra.mxu0 0
    %441 = vmatprep.subr.bf16.mxu0 0
    %442 = vmatpush1.bf16.msra.mxu0 %v425
    %443 = vmatprep.subr.bf16.mxu0 0
    %444 = vmatpush2.bf16.msra.mxu0 0
    %445 = vmatprep.subr.bf16.mxu0 0
    %446 = vmatpush2.bf16.msra.mxu0 0
    %447 = vmatprep.subr.bf16.mxu0 0
    %448 = vmatpush2.bf16.msra.mxu0 0
    %449 = vmatprep.subr.bf16.mxu0 0
    %450 = vmatpush2.bf16.msra.mxu0 0
    %451 = vmatprep.subr.bf16.mxu0 0
    %452 = vmatpush2.bf16.msra.mxu0 0
    %453 = vmatprep.subr.bf16.mxu0 0
    %454 = vmatpush2.bf16.msra.mxu0 0
    %455 = vmatprep.subr.bf16.mxu0 0
    %456 = vmatpush2.bf16.msra.mxu0 0
    %457 = vmatprep.subr.bf16.mxu0 0
    %458 = vmatpush2.bf16.msra.mxu0 0
    %459 = vmatprep.mubr.bf16.mxu0 0
    %460 = vmatmul.mubr.bf16.gmra.mxu0 %v422
    %v461 = vpop.f32.mrf.mxu0
    %v462 = vadd.f32 0.0, %v461
    %v463 = vpop.f32.mrf.mxu0
    %v464 = vpop.f32.mrf.mxu0
    %v465 = vpop.f32.mrf.mxu0
    %466 = vdwg.mxu0
    %v467 = vpack.c.bf16 %v416, %v416
    %v468 = vpack.c.bf16 %v462, %v462
    %v469 = vpack.c.b16 %v239, %v239
    %470 = vrot.lane.b32.xlu0 %v469, 96
    %v471 = vpop.permute.xlu0 %470
    %v472 = vpack.c.b16 %v241, %v241
    %473 = vrot.lane.b32.xlu0 %v472, 96
    %v474 = vpop.permute.xlu0 %473
    %v476 = vsel %vm94, %v471, 0
    %v479 = vsel %vm94, %v474, 0
    %481 = vmatprep.subr.bf16.mxu0 0
    %482 = vmatpush1.bf16.xpose.msra.mxu0 0
    %483 = vmatprep.subr.bf16.mxu0 0
    %484 = vmatpush1.bf16.xpose.msra.mxu0 0
    %485 = vmatprep.subr.bf16.mxu0 0
    %486 = vmatpush1.bf16.xpose.msra.mxu0 0
    %487 = vmatprep.subr.bf16.mxu0 0
    %488 = vmatpush1.bf16.xpose.msra.mxu0 0
    %489 = vmatprep.subr.bf16.mxu0 0
    %490 = vmatpush1.bf16.xpose.msra.mxu0 0
    %491 = vmatprep.subr.bf16.mxu0 0
    %492 = vmatpush1.bf16.xpose.msra.mxu0 0
    %493 = vmatprep.subr.bf16.mxu0 0
    %494 = vmatpush1.bf16.xpose.msra.mxu0 0
    %495 = vmatprep.subr.bf16.mxu0 0
    %496 = vmatpush1.bf16.xpose.msra.mxu0 %v479
    %497 = vmatprep.subr.bf16.mxu0 0
    %498 = vmatpush2.bf16.xpose.msra.mxu0 0
    %499 = vmatprep.subr.bf16.mxu0 0
    %500 = vmatpush2.bf16.xpose.msra.mxu0 0
    %501 = vmatprep.subr.bf16.mxu0 0
    %502 = vmatpush2.bf16.xpose.msra.mxu0 0
    %503 = vmatprep.subr.bf16.mxu0 0
    %504 = vmatpush2.bf16.xpose.msra.mxu0 0
    %505 = vmatprep.subr.bf16.mxu0 0
    %506 = vmatpush2.bf16.xpose.msra.mxu0 0
    %507 = vmatprep.subr.bf16.mxu0 0
    %508 = vmatpush2.bf16.xpose.msra.mxu0 0
    %509 = vmatprep.subr.bf16.mxu0 0
    %510 = vmatpush2.bf16.xpose.msra.mxu0 0
    %511 = vmatprep.subr.bf16.mxu0 0
    %512 = vmatpush2.bf16.xpose.msra.mxu0 0
    %513 = vmatprep.mubr.bf16.mxu0 0
    %514 = vmatmul.mubr.bf16.gmra.mxu0 %v476
    %v515 = vpop.f32.mrf.mxu0
    %v516 = vadd.f32 0.0, %v515
    %v517 = vpop.f32.mrf.mxu0
    %v518 = vpop.f32.mrf.mxu0
    %v519 = vpop.f32.mrf.mxu0
    %520 = vdwg.mxu0
    %v521 = vpack.c.b16 %v245, %v245
    %522 = vrot.lane.b32.xlu0 %v521, 96
    %v523 = vpop.permute.xlu0 %522
    %v524 = vpack.c.b16 %v247, %v247
    %525 = vrot.lane.b32.xlu0 %v524, 96
    %v526 = vpop.permute.xlu0 %525
    %v528 = vsel %vm94, %v523, 0
    %v531 = vsel %vm94, %v526, 0
    %533 = vmatprep.subr.bf16.mxu0 0
    %534 = vmatpush1.bf16.xpose.msra.mxu0 0
    %535 = vmatprep.subr.bf16.mxu0 0
    %536 = vmatpush1.bf16.xpose.msra.mxu0 0
    %537 = vmatprep.subr.bf16.mxu0 0
    %538 = vmatpush1.bf16.xpose.msra.mxu0 0
    %539 = vmatprep.subr.bf16.mxu0 0
    %540 = vmatpush1.bf16.xpose.msra.mxu0 0
    %541 = vmatprep.subr.bf16.mxu0 0
    %542 = vmatpush1.bf16.xpose.msra.mxu0 0
    %543 = vmatprep.subr.bf16.mxu0 0
    %544 = vmatpush1.bf16.xpose.msra.mxu0 0
    %545 = vmatprep.subr.bf16.mxu0 0
    %546 = vmatpush1.bf16.xpose.msra.mxu0 0
    %547 = vmatprep.subr.bf16.mxu0 0
    %548 = vmatpush1.bf16.xpose.msra.mxu0 %v531
    %549 = vmatprep.subr.bf16.mxu0 0
    %550 = vmatpush2.bf16.xpose.msra.mxu0 0
    %551 = vmatprep.subr.bf16.mxu0 0
    %552 = vmatpush2.bf16.xpose.msra.mxu0 0
    %553 = vmatprep.subr.bf16.mxu0 0
    %554 = vmatpush2.bf16.xpose.msra.mxu0 0
    %555 = vmatprep.subr.bf16.mxu0 0
    %556 = vmatpush2.bf16.xpose.msra.mxu0 0
    %557 = vmatprep.subr.bf16.mxu0 0
    %558 = vmatpush2.bf16.xpose.msra.mxu0 0
    %559 = vmatprep.subr.bf16.mxu0 0
    %560 = vmatpush2.bf16.xpose.msra.mxu0 0
    %561 = vmatprep.subr.bf16.mxu0 0
    %562 = vmatpush2.bf16.xpose.msra.mxu0 0
    %563 = vmatprep.subr.bf16.mxu0 0
    %564 = vmatpush2.bf16.xpose.msra.mxu0 0
    %565 = vmatprep.mubr.bf16.mxu0 0
    %566 = vmatmul.mubr.bf16.gmra.mxu0 %v528
    %v567 = vpop.f32.mrf.mxu0
    %v568 = vadd.f32 0.0, %v567
    %v569 = vpop.f32.mrf.mxu0
    %v570 = vpop.f32.mrf.mxu0
    %v571 = vpop.f32.mrf.mxu0
    %572 = vdwg.mxu0
    %v573 = vsel %vm349, %v516, -inf
    %574 = vmax.xlane.f32.xlu0 %v573
    %v575 = vpop.xlane.xlu0 %574
    %v576 = vsel %vm349, %v568, -inf
    %577 = vmax.xlane.f32.xlu0 %v576
    %v578 = vpop.xlane.xlu0 %577
    %v579 = vsub.f32 %v516, %v575
    %v580 = vsub.f32 %v568, %v578
    %v581 = vmul.f32 %v579, 1.442695
    %v582 = vpow.pop %v581
    %v583 = vmul.f32 %v580, 1.442695
    %v584 = vpow.pop %v583
    %v585 = vsel %vm349, %v582, 0.0
    %586 = vadd.xlane.f32.xlu0 %v585
    %v587 = vpop.xlane.xlu0 %586
    %v588 = vsel %vm349, %v584, 0.0
    %589 = vadd.xlane.f32.xlu0 %v588
    %v590 = vpop.xlane.xlu0 %589
    %v591 = vrcp.pop %v587
    %v592 = vrcp.pop %v590
    %v593 = vmul.f32 %v582, %v591
    %v594 = vmul.f32 %v584, %v592
    %v595 = vpack.c.bf16 %v593, %v593
    %v596 = vpack.c.bf16 %v594, %v594
    %v597 = vpack.c.b16 %v243, %v243
    %598 = vrot.lane.b32.xlu0 %v597, 96
    %v599 = vpop.permute.xlu0 %598
    %v601 = vsel %vm349, %v595, 0
    %v604 = vsel %vm377, %v599, 0
    %606 = vmatprep.subr.bf16.mxu0 0
    %607 = vmatpush1.bf16.msra.mxu0 0
    %608 = vmatprep.subr.bf16.mxu0 0
    %609 = vmatpush1.bf16.msra.mxu0 0
    %610 = vmatprep.subr.bf16.mxu0 0
    %611 = vmatpush1.bf16.msra.mxu0 0
    %612 = vmatprep.subr.bf16.mxu0 0
    %613 = vmatpush1.bf16.msra.mxu0 0
    %614 = vmatprep.subr.bf16.mxu0 0
    %615 = vmatpush1.bf16.msra.mxu0 0
    %616 = vmatprep.subr.bf16.mxu0 0
    %617 = vmatpush1.bf16.msra.mxu0 0
    %618 = vmatprep.subr.bf16.mxu0 0
    %619 = vmatpush1.bf16.msra.mxu0 0
    %620 = vmatprep.subr.bf16.mxu0 0
    %621 = vmatpush1.bf16.msra.mxu0 %v604
    %622 = vmatprep.subr.bf16.mxu0 0
    %623 = vmatpush2.bf16.msra.mxu0 0
    %624 = vmatprep.subr.bf16.mxu0 0
    %625 = vmatpush2.bf16.msra.mxu0 0
    %626 = vmatprep.subr.bf16.mxu0 0
    %627 = vmatpush2.bf16.msra.mxu0 0
    %628 = vmatprep.subr.bf16.mxu0 0
    %629 = vmatpush2.bf16.msra.mxu0 0
    %630 = vmatprep.subr.bf16.mxu0 0
    %631 = vmatpush2.bf16.msra.mxu0 0
    %632 = vmatprep.subr.bf16.mxu0 0
    %633 = vmatpush2.bf16.msra.mxu0 0
    %634 = vmatprep.subr.bf16.mxu0 0
    %635 = vmatpush2.bf16.msra.mxu0 0
    %636 = vmatprep.subr.bf16.mxu0 0
    %637 = vmatpush2.bf16.msra.mxu0 0
    %638 = vmatprep.mubr.bf16.mxu0 0
    %639 = vmatmul.mubr.bf16.gmra.mxu0 %v601
    %v640 = vpop.f32.mrf.mxu0
    %v641 = vadd.f32 0.0, %v640
    %v642 = vpop.f32.mrf.mxu0
    %v643 = vpop.f32.mrf.mxu0
    %v644 = vpop.f32.mrf.mxu0
    %645 = vdwg.mxu0
    %v646 = vpack.c.b16 %v249, %v249
    %647 = vrot.lane.b32.xlu0 %v646, 96
    %v648 = vpop.permute.xlu0 %647
    %v650 = vsel %vm349, %v596, 0
    %v653 = vsel %vm377, %v648, 0
    %655 = vmatprep.subr.bf16.mxu0 0
    %656 = vmatpush1.bf16.msra.mxu0 0
    %657 = vmatprep.subr.bf16.mxu0 0
    %658 = vmatpush1.bf16.msra.mxu0 0
    %659 = vmatprep.subr.bf16.mxu0 0
    %660 = vmatpush1.bf16.msra.mxu0 0
    %661 = vmatprep.subr.bf16.mxu0 0
    %662 = vmatpush1.bf16.msra.mxu0 0
    %663 = vmatprep.subr.bf16.mxu0 0
    %664 = vmatpush1.bf16.msra.mxu0 0
    %665 = vmatprep.subr.bf16.mxu0 0
    %666 = vmatpush1.bf16.msra.mxu0 0
    %667 = vmatprep.subr.bf16.mxu0 0
    %668 = vmatpush1.bf16.msra.mxu0 0
    %669 = vmatprep.subr.bf16.mxu0 0
    %670 = vmatpush1.bf16.msra.mxu0 %v653
    %671 = vmatprep.subr.bf16.mxu0 0
    %672 = vmatpush2.bf16.msra.mxu0 0
    %673 = vmatprep.subr.bf16.mxu0 0
    %674 = vmatpush2.bf16.msra.mxu0 0
    %675 = vmatprep.subr.bf16.mxu0 0
    %676 = vmatpush2.bf16.msra.mxu0 0
    %677 = vmatprep.subr.bf16.mxu0 0
    %678 = vmatpush2.bf16.msra.mxu0 0
    %679 = vmatprep.subr.bf16.mxu0 0
    %680 = vmatpush2.bf16.msra.mxu0 0
    %681 = vmatprep.subr.bf16.mxu0 0
    %682 = vmatpush2.bf16.msra.mxu0 0
    %683 = vmatprep.subr.bf16.mxu0 0
    %684 = vmatpush2.bf16.msra.mxu0 0
    %685 = vmatprep.subr.bf16.mxu0 0
    %686 = vmatpush2.bf16.msra.mxu0 0
    %687 = vmatprep.mubr.bf16.mxu0 0
    %688 = vmatmul.mubr.bf16.gmra.mxu0 %v650
    %v689 = vpop.f32.mrf.mxu0
    %v690 = vadd.f32 0.0, %v689
    %v691 = vpop.f32.mrf.mxu0
    %v692 = vpop.f32.mrf.mxu0
    %v693 = vpop.f32.mrf.mxu0
    %694 = vdwg.mxu0
    %v695 = vpack.c.bf16 %v641, %v641
    %v696 = vpack.c.bf16 %v690, %v690
    %697 = vrot.lane.b32.xlu0 %v469, 64
    %v698 = vpop.permute.xlu0 %697
    %699 = vrot.lane.b32.xlu0 %v472, 64
    %v700 = vpop.permute.xlu0 %699
    %v702 = vsel %vm94, %v698, 0
    %v705 = vsel %vm94, %v700, 0
    %707 = vmatprep.subr.bf16.mxu0 0
    %708 = vmatpush1.bf16.xpose.msra.mxu0 0
    %709 = vmatprep.subr.bf16.mxu0 0
    %710 = vmatpush1.bf16.xpose.msra.mxu0 0
    %711 = vmatprep.subr.bf16.mxu0 0
    %712 = vmatpush1.bf16.xpose.msra.mxu0 0
    %713 = vmatprep.subr.bf16.mxu0 0
    %714 = vmatpush1.bf16.xpose.msra.mxu0 0
    %715 = vmatprep.subr.bf16.mxu0 0
    %716 = vmatpush1.bf16.xpose.msra.mxu0 0
    %717 = vmatprep.subr.bf16.mxu0 0
    %718 = vmatpush1.bf16.xpose.msra.mxu0 0
    %719 = vmatprep.subr.bf16.mxu0 0
    %720 = vmatpush1.bf16.xpose.msra.mxu0 0
    %721 = vmatprep.subr.bf16.mxu0 0
    %722 = vmatpush1.bf16.xpose.msra.mxu0 %v705
    %723 = vmatprep.subr.bf16.mxu0 0
    %724 = vmatpush2.bf16.xpose.msra.mxu0 0
    %725 = vmatprep.subr.bf16.mxu0 0
    %726 = vmatpush2.bf16.xpose.msra.mxu0 0
    %727 = vmatprep.subr.bf16.mxu0 0
    %728 = vmatpush2.bf16.xpose.msra.mxu0 0
    %729 = vmatprep.subr.bf16.mxu0 0
    %730 = vmatpush2.bf16.xpose.msra.mxu0 0
    %731 = vmatprep.subr.bf16.mxu0 0
    %732 = vmatpush2.bf16.xpose.msra.mxu0 0
    %733 = vmatprep.subr.bf16.mxu0 0
    %734 = vmatpush2.bf16.xpose.msra.mxu0 0
    %735 = vmatprep.subr.bf16.mxu0 0
    %736 = vmatpush2.bf16.xpose.msra.mxu0 0
    %737 = vmatprep.subr.bf16.mxu0 0
    %738 = vmatpush2.bf16.xpose.msra.mxu0 0
    %739 = vmatprep.mubr.bf16.mxu0 0
    %740 = vmatmul.mubr.bf16.gmra.mxu0 %v702
    %v741 = vpop.f32.mrf.mxu0
    %v742 = vadd.f32 0.0, %v741
    %v743 = vpop.f32.mrf.mxu0
    %v744 = vpop.f32.mrf.mxu0
    %v745 = vpop.f32.mrf.mxu0
    %746 = vdwg.mxu0
    %747 = vrot.lane.b32.xlu0 %v521, 64
    %v748 = vpop.permute.xlu0 %747
    %749 = vrot.lane.b32.xlu0 %v524, 64
    %v750 = vpop.permute.xlu0 %749
    %v752 = vsel %vm94, %v748, 0
    %v755 = vsel %vm94, %v750, 0
    %757 = vmatprep.subr.bf16.mxu0 0
    %758 = vmatpush1.bf16.xpose.msra.mxu0 0
    %759 = vmatprep.subr.bf16.mxu0 0
    %760 = vmatpush1.bf16.xpose.msra.mxu0 0
    %761 = vmatprep.subr.bf16.mxu0 0
    %762 = vmatpush1.bf16.xpose.msra.mxu0 0
    %763 = vmatprep.subr.bf16.mxu0 0
    %764 = vmatpush1.bf16.xpose.msra.mxu0 0
    %765 = vmatprep.subr.bf16.mxu0 0
    %766 = vmatpush1.bf16.xpose.msra.mxu0 0
    %767 = vmatprep.subr.bf16.mxu0 0
    %768 = vmatpush1.bf16.xpose.msra.mxu0 0
    %769 = vmatprep.subr.bf16.mxu0 0
    %770 = vmatpush1.bf16.xpose.msra.mxu0 0
    %771 = vmatprep.subr.bf16.mxu0 0
    %772 = vmatpush1.bf16.xpose.msra.mxu0 %v755
    %773 = vmatprep.subr.bf16.mxu0 0
    %774 = vmatpush2.bf16.xpose.msra.mxu0 0
    %775 = vmatprep.subr.bf16.mxu0 0
    %776 = vmatpush2.bf16.xpose.msra.mxu0 0
    %777 = vmatprep.subr.bf16.mxu0 0
    %778 = vmatpush2.bf16.xpose.msra.mxu0 0
    %779 = vmatprep.subr.bf16.mxu0 0
    %780 = vmatpush2.bf16.xpose.msra.mxu0 0
    %781 = vmatprep.subr.bf16.mxu0 0
    %782 = vmatpush2.bf16.xpose.msra.mxu0 0
    %783 = vmatprep.subr.bf16.mxu0 0
    %784 = vmatpush2.bf16.xpose.msra.mxu0 0
    %785 = vmatprep.subr.bf16.mxu0 0
    %786 = vmatpush2.bf16.xpose.msra.mxu0 0
    %787 = vmatprep.subr.bf16.mxu0 0
    %788 = vmatpush2.bf16.xpose.msra.mxu0 0
    %789 = vmatprep.mubr.bf16.mxu0 0
    %790 = vmatmul.mubr.bf16.gmra.mxu0 %v752
    %v791 = vpop.f32.mrf.mxu0
    %v792 = vadd.f32 0.0, %v791
    %v793 = vpop.f32.mrf.mxu0
    %v794 = vpop.f32.mrf.mxu0
    %v795 = vpop.f32.mrf.mxu0
    %796 = vdwg.mxu0
    %v797 = vsel %vm349, %v742, -inf
    %798 = vmax.xlane.f32.xlu0 %v797
    %v799 = vpop.xlane.xlu0 %798
    %v800 = vsel %vm349, %v792, -inf
    %801 = vmax.xlane.f32.xlu0 %v800
    %v802 = vpop.xlane.xlu0 %801
    %v803 = vsub.f32 %v742, %v799
    %v804 = vsub.f32 %v792, %v802
    %v805 = vmul.f32 %v803, 1.442695
    %v806 = vpow.pop %v805
    %v807 = vmul.f32 %v804, 1.442695
    %v808 = vpow.pop %v807
    %v809 = vsel %vm349, %v806, 0.0
    %810 = vadd.xlane.f32.xlu0 %v809
    %v811 = vpop.xlane.xlu0 %810
    %v812 = vsel %vm349, %v808, 0.0
    %813 = vadd.xlane.f32.xlu0 %v812
    %v814 = vpop.xlane.xlu0 %813
    %v815 = vrcp.pop %v811
    %v816 = vrcp.pop %v814
    %v817 = vmul.f32 %v806, %v815
    %v818 = vmul.f32 %v808, %v816
    %v819 = vpack.c.bf16 %v817, %v817
    %v820 = vpack.c.bf16 %v818, %v818
    %821 = vrot.lane.b32.xlu0 %v597, 64
    %v822 = vpop.permute.xlu0 %821
    %v824 = vsel %vm349, %v819, 0
    %v827 = vsel %vm377, %v822, 0
    %829 = vmatprep.subr.bf16.mxu0 0
    %830 = vmatpush1.bf16.msra.mxu0 0
    %831 = vmatprep.subr.bf16.mxu0 0
    %832 = vmatpush1.bf16.msra.mxu0 0
    %833 = vmatprep.subr.bf16.mxu0 0
    %834 = vmatpush1.bf16.msra.mxu0 0
    %835 = vmatprep.subr.bf16.mxu0 0
    %836 = vmatpush1.bf16.msra.mxu0 0
    %837 = vmatprep.subr.bf16.mxu0 0
    %838 = vmatpush1.bf16.msra.mxu0 0
    %839 = vmatprep.subr.bf16.mxu0 0
    %840 = vmatpush1.bf16.msra.mxu0 0
    %841 = vmatprep.subr.bf16.mxu0 0
    %842 = vmatpush1.bf16.msra.mxu0 0
    %843 = vmatprep.subr.bf16.mxu0 0
    %844 = vmatpush1.bf16.msra.mxu0 %v827
    %845 = vmatprep.subr.bf16.mxu0 0
    %846 = vmatpush2.bf16.msra.mxu0 0
    %847 = vmatprep.subr.bf16.mxu0 0
    %848 = vmatpush2.bf16.msra.mxu0 0
    %849 = vmatprep.subr.bf16.mxu0 0
    %850 = vmatpush2.bf16.msra.mxu0 0
    %851 = vmatprep.subr.bf16.mxu0 0
    %852 = vmatpush2.bf16.msra.mxu0 0
    %853 = vmatprep.subr.bf16.mxu0 0
    %854 = vmatpush2.bf16.msra.mxu0 0
    %855 = vmatprep.subr.bf16.mxu0 0
    %856 = vmatpush2.bf16.msra.mxu0 0
    %857 = vmatprep.subr.bf16.mxu0 0
    %858 = vmatpush2.bf16.msra.mxu0 0
    %859 = vmatprep.subr.bf16.mxu0 0
    %860 = vmatpush2.bf16.msra.mxu0 0
    %861 = vmatprep.mubr.bf16.mxu0 0
    %862 = vmatmul.mubr.bf16.gmra.mxu0 %v824
    %v863 = vpop.f32.mrf.mxu0
    %v864 = vadd.f32 0.0, %v863
    %v865 = vpop.f32.mrf.mxu0
    %v866 = vpop.f32.mrf.mxu0
    %v867 = vpop.f32.mrf.mxu0
    %868 = vdwg.mxu0
    %869 = vrot.lane.b32.xlu0 %v646, 64
    %v870 = vpop.permute.xlu0 %869
    %v872 = vsel %vm349, %v820, 0
    %v875 = vsel %vm377, %v870, 0
    %877 = vmatprep.subr.bf16.mxu0 0
    %878 = vmatpush1.bf16.msra.mxu0 0
    %879 = vmatprep.subr.bf16.mxu0 0
    %880 = vmatpush1.bf16.msra.mxu0 0
    %881 = vmatprep.subr.bf16.mxu0 0
    %882 = vmatpush1.bf16.msra.mxu0 0
    %883 = vmatprep.subr.bf16.mxu0 0
    %884 = vmatpush1.bf16.msra.mxu0 0
    %885 = vmatprep.subr.bf16.mxu0 0
    %886 = vmatpush1.bf16.msra.mxu0 0
    %887 = vmatprep.subr.bf16.mxu0 0
    %888 = vmatpush1.bf16.msra.mxu0 0
    %889 = vmatprep.subr.bf16.mxu0 0
    %890 = vmatpush1.bf16.msra.mxu0 0
    %891 = vmatprep.subr.bf16.mxu0 0
    %892 = vmatpush1.bf16.msra.mxu0 %v875
    %893 = vmatprep.subr.bf16.mxu0 0
    %894 = vmatpush2.bf16.msra.mxu0 0
    %895 = vmatprep.subr.bf16.mxu0 0
    %896 = vmatpush2.bf16.msra.mxu0 0
    %897 = vmatprep.subr.bf16.mxu0 0
    %898 = vmatpush2.bf16.msra.mxu0 0
    %899 = vmatprep.subr.bf16.mxu0 0
    %900 = vmatpush2.bf16.msra.mxu0 0
    %901 = vmatprep.subr.bf16.mxu0 0
    %902 = vmatpush2.bf16.msra.mxu0 0
    %903 = vmatprep.subr.bf16.mxu0 0
    %904 = vmatpush2.bf16.msra.mxu0 0
    %905 = vmatprep.subr.bf16.mxu0 0
    %906 = vmatpush2.bf16.msra.mxu0 0
    %907 = vmatprep.subr.bf16.mxu0 0
    %908 = vmatpush2.bf16.msra.mxu0 0
    %909 = vmatprep.mubr.bf16.mxu0 0
    %910 = vmatmul.mubr.bf16.gmra.mxu0 %v872
    %v911 = vpop.f32.mrf.mxu0
    %v912 = vadd.f32 0.0, %v911
    %v913 = vpop.f32.mrf.mxu0
    %v914 = vpop.f32.mrf.mxu0
    %v915 = vpop.f32.mrf.mxu0
    %916 = vdwg.mxu0
    %v917 = vpack.c.bf16 %v864, %v864
    %v918 = vpack.c.bf16 %v912, %v912
    %919 = vrot.lane.b32.xlu0 %v469, 32
    %v920 = vpop.permute.xlu0 %919
    %921 = vrot.lane.b32.xlu0 %v472, 32
    %v922 = vpop.permute.xlu0 %921
    %v924 = vsel %vm94, %v920, 0
    %v927 = vsel %vm94, %v922, 0
    %929 = vmatprep.subr.bf16.mxu0 0
    %930 = vmatpush1.bf16.xpose.msra.mxu0 0
    %931 = vmatprep.subr.bf16.mxu0 0
    %932 = vmatpush1.bf16.xpose.msra.mxu0 0
    %933 = vmatprep.subr.bf16.mxu0 0
    %934 = vmatpush1.bf16.xpose.msra.mxu0 0
    %935 = vmatprep.subr.bf16.mxu0 0
    %936 = vmatpush1.bf16.xpose.msra.mxu0 0
    %937 = vmatprep.subr.bf16.mxu0 0
    %938 = vmatpush1.bf16.xpose.msra.mxu0 0
    %939 = vmatprep.subr.bf16.mxu0 0
    %940 = vmatpush1.bf16.xpose.msra.mxu0 0
    %941 = vmatprep.subr.bf16.mxu0 0
    %942 = vmatpush1.bf16.xpose.msra.mxu0 0
    %943 = vmatprep.subr.bf16.mxu0 0
    %944 = vmatpush1.bf16.xpose.msra.mxu0 %v927
    %945 = vmatprep.subr.bf16.mxu0 0
    %946 = vmatpush2.bf16.xpose.msra.mxu0 0
    %947 = vmatprep.subr.bf16.mxu0 0
    %948 = vmatpush2.bf16.xpose.msra.mxu0 0
    %949 = vmatprep.subr.bf16.mxu0 0
    %950 = vmatpush2.bf16.xpose.msra.mxu0 0
    %951 = vmatprep.subr.bf16.mxu0 0
    %952 = vmatpush2.bf16.xpose.msra.mxu0 0
    %953 = vmatprep.subr.bf16.mxu0 0
    %954 = vmatpush2.bf16.xpose.msra.mxu0 0
    %955 = vmatprep.subr.bf16.mxu0 0
    %956 = vmatpush2.bf16.xpose.msra.mxu0 0
    %957 = vmatprep.subr.bf16.mxu0 0
    %958 = vmatpush2.bf16.xpose.msra.mxu0 0
    %959 = vmatprep.subr.bf16.mxu0 0
    %960 = vmatpush2.bf16.xpose.msra.mxu0 0
    %961 = vmatprep.mubr.bf16.mxu0 0
    %962 = vmatmul.mubr.bf16.gmra.mxu0 %v924
    %v963 = vpop.f32.mrf.mxu0
    %v964 = vadd.f32 0.0, %v963
    %v965 = vpop.f32.mrf.mxu0
    %v966 = vpop.f32.mrf.mxu0
    %v967 = vpop.f32.mrf.mxu0
    %968 = vdwg.mxu0
    %969 = vrot.lane.b32.xlu0 %v521, 32
    %v970 = vpop.permute.xlu0 %969
    %971 = vrot.lane.b32.xlu0 %v524, 32
    %v972 = vpop.permute.xlu0 %971
    %v974 = vsel %vm94, %v970, 0
    %v977 = vsel %vm94, %v972, 0
    %979 = vmatprep.subr.bf16.mxu0 0
    %980 = vmatpush1.bf16.xpose.msra.mxu0 0
    %981 = vmatprep.subr.bf16.mxu0 0
    %982 = vmatpush1.bf16.xpose.msra.mxu0 0
    %983 = vmatprep.subr.bf16.mxu0 0
    %984 = vmatpush1.bf16.xpose.msra.mxu0 0
    %985 = vmatprep.subr.bf16.mxu0 0
    %986 = vmatpush1.bf16.xpose.msra.mxu0 0
    %987 = vmatprep.subr.bf16.mxu0 0
    %988 = vmatpush1.bf16.xpose.msra.mxu0 0
    %989 = vmatprep.subr.bf16.mxu0 0
    %990 = vmatpush1.bf16.xpose.msra.mxu0 0
    %991 = vmatprep.subr.bf16.mxu0 0
    %992 = vmatpush1.bf16.xpose.msra.mxu0 0
    %993 = vmatprep.subr.bf16.mxu0 0
    %994 = vmatpush1.bf16.xpose.msra.mxu0 %v977
    %995 = vmatprep.subr.bf16.mxu0 0
    %996 = vmatpush2.bf16.xpose.msra.mxu0 0
    %997 = vmatprep.subr.bf16.mxu0 0
    %998 = vmatpush2.bf16.xpose.msra.mxu0 0
    %999 = vmatprep.subr.bf16.mxu0 0
    %1000 = vmatpush2.bf16.xpose.msra.mxu0 0
    %1001 = vmatprep.subr.bf16.mxu0 0
    %1002 = vmatpush2.bf16.xpose.msra.mxu0 0
    %1003 = vmatprep.subr.bf16.mxu0 0
    %1004 = vmatpush2.bf16.xpose.msra.mxu0 0
    %1005 = vmatprep.subr.bf16.mxu0 0
    %1006 = vmatpush2.bf16.xpose.msra.mxu0 0
    %1007 = vmatprep.subr.bf16.mxu0 0
    %1008 = vmatpush2.bf16.xpose.msra.mxu0 0
    %1009 = vmatprep.subr.bf16.mxu0 0
    %1010 = vmatpush2.bf16.xpose.msra.mxu0 0
    %1011 = vmatprep.mubr.bf16.mxu0 0
    %1012 = vmatmul.mubr.bf16.gmra.mxu0 %v974
    %v1013 = vpop.f32.mrf.mxu0
    %v1014 = vadd.f32 0.0, %v1013
    %v1015 = vpop.f32.mrf.mxu0
    %v1016 = vpop.f32.mrf.mxu0
    %v1017 = vpop.f32.mrf.mxu0
    %1018 = vdwg.mxu0
    %v1019 = vsel %vm349, %v964, -inf
    %1020 = vmax.xlane.f32.xlu0 %v1019
    %v1021 = vpop.xlane.xlu0 %1020
    %v1022 = vsel %vm349, %v1014, -inf
    %1023 = vmax.xlane.f32.xlu0 %v1022
    %v1024 = vpop.xlane.xlu0 %1023
    %v1025 = vsub.f32 %v964, %v1021
    %v1026 = vsub.f32 %v1014, %v1024
    %v1027 = vmul.f32 %v1025, 1.442695
    %v1028 = vpow.pop %v1027
    %v1029 = vmul.f32 %v1026, 1.442695
    %v1030 = vpow.pop %v1029
    %v1031 = vsel %vm349, %v1028, 0.0
    %1032 = vadd.xlane.f32.xlu0 %v1031
    %v1033 = vpop.xlane.xlu0 %1032
    %v1034 = vsel %vm349, %v1030, 0.0
    %1035 = vadd.xlane.f32.xlu0 %v1034
    %v1036 = vpop.xlane.xlu0 %1035
    %v1037 = vrcp.pop %v1033
    %v1038 = vrcp.pop %v1036
    %v1039 = vmul.f32 %v1028, %v1037
    %v1040 = vmul.f32 %v1030, %v1038
    %v1041 = vpack.c.bf16 %v1039, %v1039
    %v1042 = vpack.c.bf16 %v1040, %v1040
    %1043 = vrot.lane.b32.xlu0 %v597, 32
    %v1044 = vpop.permute.xlu0 %1043
    %v1046 = vsel %vm349, %v1041, 0
    %v1049 = vsel %vm377, %v1044, 0
    %1051 = vmatprep.subr.bf16.mxu0 0
    %1052 = vmatpush1.bf16.msra.mxu0 0
    %1053 = vmatprep.subr.bf16.mxu0 0
    %1054 = vmatpush1.bf16.msra.mxu0 0
    %1055 = vmatprep.subr.bf16.mxu0 0
    %1056 = vmatpush1.bf16.msra.mxu0 0
    %1057 = vmatprep.subr.bf16.mxu0 0
    %1058 = vmatpush1.bf16.msra.mxu0 0
    %1059 = vmatprep.subr.bf16.mxu0 0
    %1060 = vmatpush1.bf16.msra.mxu0 0
    %1061 = vmatprep.subr.bf16.mxu0 0
    %1062 = vmatpush1.bf16.msra.mxu0 0
    %1063 = vmatprep.subr.bf16.mxu0 0
    %1064 = vmatpush1.bf16.msra.mxu0 0
    %1065 = vmatprep.subr.bf16.mxu0 0
    %1066 = vmatpush1.bf16.msra.mxu0 %v1049
    %1067 = vmatprep.subr.bf16.mxu0 0
    %1068 = vmatpush2.bf16.msra.mxu0 0
    %1069 = vmatprep.subr.bf16.mxu0 0
    %1070 = vmatpush2.bf16.msra.mxu0 0
    %1071 = vmatprep.subr.bf16.mxu0 0
    %1072 = vmatpush2.bf16.msra.mxu0 0
    %1073 = vmatprep.subr.bf16.mxu0 0
    %1074 = vmatpush2.bf16.msra.mxu0 0
    %1075 = vmatprep.subr.bf16.mxu0 0
    %1076 = vmatpush2.bf16.msra.mxu0 0
    %1077 = vmatprep.subr.bf16.mxu0 0
    %1078 = vmatpush2.bf16.msra.mxu0 0
    %1079 = vmatprep.subr.bf16.mxu0 0
    %1080 = vmatpush2.bf16.msra.mxu0 0
    %1081 = vmatprep.subr.bf16.mxu0 0
    %1082 = vmatpush2.bf16.msra.mxu0 0
    %1083 = vmatprep.mubr.bf16.mxu0 0
    %1084 = vmatmul.mubr.bf16.gmra.mxu0 %v1046
    %v1085 = vpop.f32.mrf.mxu0
    %v1086 = vadd.f32 0.0, %v1085
    %v1087 = vpop.f32.mrf.mxu0
    %v1088 = vpop.f32.mrf.mxu0
    %v1089 = vpop.f32.mrf.mxu0
    %1090 = vdwg.mxu0
    %1091 = vrot.lane.b32.xlu0 %v646, 32
    %v1092 = vpop.permute.xlu0 %1091
    %v1094 = vsel %vm349, %v1042, 0
    %v1097 = vsel %vm377, %v1092, 0
    %1099 = vmatprep.subr.bf16.mxu0 0
    %1100 = vmatpush1.bf16.msra.mxu0 0
    %1101 = vmatprep.subr.bf16.mxu0 0
    %1102 = vmatpush1.bf16.msra.mxu0 0
    %1103 = vmatprep.subr.bf16.mxu0 0
    %1104 = vmatpush1.bf16.msra.mxu0 0
    %1105 = vmatprep.subr.bf16.mxu0 0
    %1106 = vmatpush1.bf16.msra.mxu0 0
    %1107 = vmatprep.subr.bf16.mxu0 0
    %1108 = vmatpush1.bf16.msra.mxu0 0
    %1109 = vmatprep.subr.bf16.mxu0 0
    %1110 = vmatpush1.bf16.msra.mxu0 0
    %1111 = vmatprep.subr.bf16.mxu0 0
    %1112 = vmatpush1.bf16.msra.mxu0 0
    %1113 = vmatprep.subr.bf16.mxu0 0
    %1114 = vmatpush1.bf16.msra.mxu0 %v1097
    %1115 = vmatprep.subr.bf16.mxu0 0
    %1116 = vmatpush2.bf16.msra.mxu0 0
    %1117 = vmatprep.subr.bf16.mxu0 0
    %1118 = vmatpush2.bf16.msra.mxu0 0
    %1119 = vmatprep.subr.bf16.mxu0 0
    %1120 = vmatpush2.bf16.msra.mxu0 0
    %1121 = vmatprep.subr.bf16.mxu0 0
    %1122 = vmatpush2.bf16.msra.mxu0 0
    %1123 = vmatprep.subr.bf16.mxu0 0
    %1124 = vmatpush2.bf16.msra.mxu0 0
    %1125 = vmatprep.subr.bf16.mxu0 0
    %1126 = vmatpush2.bf16.msra.mxu0 0
    %1127 = vmatprep.subr.bf16.mxu0 0
    %1128 = vmatpush2.bf16.msra.mxu0 0
    %1129 = vmatprep.subr.bf16.mxu0 0
    %1130 = vmatpush2.bf16.msra.mxu0 0
    %1131 = vmatprep.mubr.bf16.mxu0 0
    %1132 = vmatmul.mubr.bf16.gmra.mxu0 %v1094
    %v1133 = vpop.f32.mrf.mxu0
    %v1134 = vadd.f32 0.0, %v1133
    %v1135 = vpop.f32.mrf.mxu0
    %v1136 = vpop.f32.mrf.mxu0
    %v1137 = vpop.f32.mrf.mxu0
    %1138 = vdwg.mxu0
    %v1139 = vpack.c.bf16 %v1086, %v1086
    %v1140 = vpack.c.bf16 %v1134, %v1134
    %v1141 = vrot.slane %v251, 4
    %v1142 = vrot.slane %v252, 4
    %v1144 = vsel %vm94, %v1141, 0
    %v1147 = vsel %vm94, %v1142, 0
    %1149 = vmatprep.subr.bf16.mxu0 0
    %1150 = vmatpush1.bf16.xpose.msra.mxu0 0
    %1151 = vmatprep.subr.bf16.mxu0 0
    %1152 = vmatpush1.bf16.xpose.msra.mxu0 0
    %1153 = vmatprep.subr.bf16.mxu0 0
    %1154 = vmatpush1.bf16.xpose.msra.mxu0 0
    %1155 = vmatprep.subr.bf16.mxu0 0
    %1156 = vmatpush1.bf16.xpose.msra.mxu0 0
    %1157 = vmatprep.subr.bf16.mxu0 0
    %1158 = vmatpush1.bf16.xpose.msra.mxu0 0
    %1159 = vmatprep.subr.bf16.mxu0 0
    %1160 = vmatpush1.bf16.xpose.msra.mxu0 0
    %1161 = vmatprep.subr.bf16.mxu0 0
    %1162 = vmatpush1.bf16.xpose.msra.mxu0 0
    %1163 = vmatprep.subr.bf16.mxu0 0
    %1164 = vmatpush1.bf16.xpose.msra.mxu0 %v1147
    %1165 = vmatprep.subr.bf16.mxu0 0
    %1166 = vmatpush2.bf16.xpose.msra.mxu0 0
    %1167 = vmatprep.subr.bf16.mxu0 0
    %1168 = vmatpush2.bf16.xpose.msra.mxu0 0
    %1169 = vmatprep.subr.bf16.mxu0 0
    %1170 = vmatpush2.bf16.xpose.msra.mxu0 0
    %1171 = vmatprep.subr.bf16.mxu0 0
    %1172 = vmatpush2.bf16.xpose.msra.mxu0 0
    %1173 = vmatprep.subr.bf16.mxu0 0
    %1174 = vmatpush2.bf16.xpose.msra.mxu0 0
    %1175 = vmatprep.subr.bf16.mxu0 0
    %1176 = vmatpush2.bf16.xpose.msra.mxu0 0
    %1177 = vmatprep.subr.bf16.mxu0 0
    %1178 = vmatpush2.bf16.xpose.msra.mxu0 0
    %1179 = vmatprep.subr.bf16.mxu0 0
    %1180 = vmatpush2.bf16.xpose.msra.mxu0 0
    %1181 = vmatprep.mubr.bf16.mxu0 0
    %1182 = vmatmul.mubr.bf16.gmra.mxu0 %v1144
    %v1183 = vpop.f32.mrf.mxu0
    %v1184 = vadd.f32 0.0, %v1183
    %v1185 = vpop.f32.mrf.mxu0
    %v1186 = vpop.f32.mrf.mxu0
    %v1187 = vpop.f32.mrf.mxu0
    %1188 = vdwg.mxu0
    %v1189 = vrot.slane %v254, 4
    %v1190 = vrot.slane %v255, 4
    %v1192 = vsel %vm94, %v1189, 0
    %v1195 = vsel %vm94, %v1190, 0
    %1197 = vmatprep.subr.bf16.mxu0 0
    %1198 = vmatpush1.bf16.xpose.msra.mxu0 0
    %1199 = vmatprep.subr.bf16.mxu0 0
    %1200 = vmatpush1.bf16.xpose.msra.mxu0 0
    %1201 = vmatprep.subr.bf16.mxu0 0
    %1202 = vmatpush1.bf16.xpose.msra.mxu0 0
    %1203 = vmatprep.subr.bf16.mxu0 0
    %1204 = vmatpush1.bf16.xpose.msra.mxu0 0
    %1205 = vmatprep.subr.bf16.mxu0 0
    %1206 = vmatpush1.bf16.xpose.msra.mxu0 0
    %1207 = vmatprep.subr.bf16.mxu0 0
    %1208 = vmatpush1.bf16.xpose.msra.mxu0 0
    %1209 = vmatprep.subr.bf16.mxu0 0
    %1210 = vmatpush1.bf16.xpose.msra.mxu0 0
    %1211 = vmatprep.subr.bf16.mxu0 0
    %1212 = vmatpush1.bf16.xpose.msra.mxu0 %v1195
    %1213 = vmatprep.subr.bf16.mxu0 0
    %1214 = vmatpush2.bf16.xpose.msra.mxu0 0
    %1215 = vmatprep.subr.bf16.mxu0 0
    %1216 = vmatpush2.bf16.xpose.msra.mxu0 0
    %1217 = vmatprep.subr.bf16.mxu0 0
    %1218 = vmatpush2.bf16.xpose.msra.mxu0 0
    %1219 = vmatprep.subr.bf16.mxu0 0
    %1220 = vmatpush2.bf16.xpose.msra.mxu0 0
    %1221 = vmatprep.subr.bf16.mxu0 0
    %1222 = vmatpush2.bf16.xpose.msra.mxu0 0
    %1223 = vmatprep.subr.bf16.mxu0 0
    %1224 = vmatpush2.bf16.xpose.msra.mxu0 0
    %1225 = vmatprep.subr.bf16.mxu0 0
    %1226 = vmatpush2.bf16.xpose.msra.mxu0 0
    %1227 = vmatprep.subr.bf16.mxu0 0
    %1228 = vmatpush2.bf16.xpose.msra.mxu0 0
    %1229 = vmatprep.mubr.bf16.mxu0 0
    %1230 = vmatmul.mubr.bf16.gmra.mxu0 %v1192
    %v1231 = vpop.f32.mrf.mxu0
    %v1232 = vadd.f32 0.0, %v1231
    %v1233 = vpop.f32.mrf.mxu0
    %v1234 = vpop.f32.mrf.mxu0
    %v1235 = vpop.f32.mrf.mxu0
    %1236 = vdwg.mxu0
    %v1237 = vsel %vm349, %v1184, -inf
    %1238 = vmax.xlane.f32.xlu0 %v1237
    %v1239 = vpop.xlane.xlu0 %1238
    %v1240 = vsel %vm349, %v1232, -inf
    %1241 = vmax.xlane.f32.xlu0 %v1240
    %v1242 = vpop.xlane.xlu0 %1241
    %v1243 = vsub.f32 %v1184, %v1239
    %v1244 = vsub.f32 %v1232, %v1242
    %v1245 = vmul.f32 %v1243, 1.442695
    %v1246 = vpow.pop %v1245
    %v1247 = vmul.f32 %v1244, 1.442695
    %v1248 = vpow.pop %v1247
    %v1249 = vsel %vm349, %v1246, 0.0
    %1250 = vadd.xlane.f32.xlu0 %v1249
    %v1251 = vpop.xlane.xlu0 %1250
    %v1252 = vsel %vm349, %v1248, 0.0
    %1253 = vadd.xlane.f32.xlu0 %v1252
    %v1254 = vpop.xlane.xlu0 %1253
    %v1255 = vrcp.pop %v1251
    %v1256 = vrcp.pop %v1254
    %v1257 = vmul.f32 %v1246, %v1255
    %v1258 = vmul.f32 %v1248, %v1256
    %v1259 = vpack.c.bf16 %v1257, %v1257
    %v1260 = vpack.c.bf16 %v1258, %v1258
    %v1261 = vrot.slane %v253, 4
    %v1263 = vsel %vm349, %v1259, 0
    %v1266 = vsel %vm377, %v1261, 0
    %1268 = vmatprep.subr.bf16.mxu0 0
    %1269 = vmatpush1.bf16.msra.mxu0 0
    %1270 = vmatprep.subr.bf16.mxu0 0
    %1271 = vmatpush1.bf16.msra.mxu0 0
    %1272 = vmatprep.subr.bf16.mxu0 0
    %1273 = vmatpush1.bf16.msra.mxu0 0
    %1274 = vmatprep.subr.bf16.mxu0 0
    %1275 = vmatpush1.bf16.msra.mxu0 0
    %1276 = vmatprep.subr.bf16.mxu0 0
    %1277 = vmatpush1.bf16.msra.mxu0 0
    %1278 = vmatprep.subr.bf16.mxu0 0
    %1279 = vmatpush1.bf16.msra.mxu0 0
    %1280 = vmatprep.subr.bf16.mxu0 0
    %1281 = vmatpush1.bf16.msra.mxu0 0
    %1282 = vmatprep.subr.bf16.mxu0 0
    %1283 = vmatpush1.bf16.msra.mxu0 %v1266
    %1284 = vmatprep.subr.bf16.mxu0 0
    %1285 = vmatpush2.bf16.msra.mxu0 0
    %1286 = vmatprep.subr.bf16.mxu0 0
    %1287 = vmatpush2.bf16.msra.mxu0 0
    %1288 = vmatprep.subr.bf16.mxu0 0
    %1289 = vmatpush2.bf16.msra.mxu0 0
    %1290 = vmatprep.subr.bf16.mxu0 0
    %1291 = vmatpush2.bf16.msra.mxu0 0
    %1292 = vmatprep.subr.bf16.mxu0 0
    %1293 = vmatpush2.bf16.msra.mxu0 0
    %1294 = vmatprep.subr.bf16.mxu0 0
    %1295 = vmatpush2.bf16.msra.mxu0 0
    %1296 = vmatprep.subr.bf16.mxu0 0
    %1297 = vmatpush2.bf16.msra.mxu0 0
    %1298 = vmatprep.subr.bf16.mxu0 0
    %1299 = vmatpush2.bf16.msra.mxu0 0
    %1300 = vmatprep.mubr.bf16.mxu0 0
    %1301 = vmatmul.mubr.bf16.gmra.mxu0 %v1263
    %v1302 = vpop.f32.mrf.mxu0
    %v1303 = vadd.f32 0.0, %v1302
    %v1304 = vpop.f32.mrf.mxu0
    %v1305 = vpop.f32.mrf.mxu0
    %v1306 = vpop.f32.mrf.mxu0
    %1307 = vdwg.mxu0
    %v1308 = vrot.slane %v256, 4
    %v1310 = vsel %vm349, %v1260, 0
    %v1313 = vsel %vm377, %v1308, 0
    %1315 = vmatprep.subr.bf16.mxu0 0
    %1316 = vmatpush1.bf16.msra.mxu0 0
    %1317 = vmatprep.subr.bf16.mxu0 0
    %1318 = vmatpush1.bf16.msra.mxu0 0
    %1319 = vmatprep.subr.bf16.mxu0 0
    %1320 = vmatpush1.bf16.msra.mxu0 0
    %1321 = vmatprep.subr.bf16.mxu0 0
    %1322 = vmatpush1.bf16.msra.mxu0 0
    %1323 = vmatprep.subr.bf16.mxu0 0
    %1324 = vmatpush1.bf16.msra.mxu0 0
    %1325 = vmatprep.subr.bf16.mxu0 0
    %1326 = vmatpush1.bf16.msra.mxu0 0
    %1327 = vmatprep.subr.bf16.mxu0 0
    %1328 = vmatpush1.bf16.msra.mxu0 0
    %1329 = vmatprep.subr.bf16.mxu0 0
    %1330 = vmatpush1.bf16.msra.mxu0 %v1313
    %1331 = vmatprep.subr.bf16.mxu0 0
    %1332 = vmatpush2.bf16.msra.mxu0 0
    %1333 = vmatprep.subr.bf16.mxu0 0
    %1334 = vmatpush2.bf16.msra.mxu0 0
    %1335 = vmatprep.subr.bf16.mxu0 0
    %1336 = vmatpush2.bf16.msra.mxu0 0
    %1337 = vmatprep.subr.bf16.mxu0 0
    %1338 = vmatpush2.bf16.msra.mxu0 0
    %1339 = vmatprep.subr.bf16.mxu0 0
    %1340 = vmatpush2.bf16.msra.mxu0 0
    %1341 = vmatprep.subr.bf16.mxu0 0
    %1342 = vmatpush2.bf16.msra.mxu0 0
    %1343 = vmatprep.subr.bf16.mxu0 0
    %1344 = vmatpush2.bf16.msra.mxu0 0
    %1345 = vmatprep.subr.bf16.mxu0 0
    %1346 = vmatpush2.bf16.msra.mxu0 0
    %1347 = vmatprep.mubr.bf16.mxu0 0
    %1348 = vmatmul.mubr.bf16.gmra.mxu0 %v1310
    %v1349 = vpop.f32.mrf.mxu0
    %v1350 = vadd.f32 0.0, %v1349
    %v1351 = vpop.f32.mrf.mxu0
    %v1352 = vpop.f32.mrf.mxu0
    %v1353 = vpop.f32.mrf.mxu0
    %1354 = vdwg.mxu0
    %v1355 = vpack.c.bf16 %v1303, %v1303
    %v1356 = vpack.c.bf16 %v1350, %v1350
    %1357 = vrot.lane.b32.xlu0 %v251, 96
    %v1358 = vpop.permute.xlu0 %1357
    %v1359 = vrot.slane %v1358, 4
    %1360 = vrot.lane.b32.xlu0 %v252, 96
    %v1361 = vpop.permute.xlu0 %1360
    %v1362 = vrot.slane %v1361, 4
    %v1364 = vsel %vm94, %v1359, 0
    %v1367 = vsel %vm94, %v1362, 0
    %1369 = vmatprep.subr.bf16.mxu0 0
    %1370 = vmatpush1.bf16.xpose.msra.mxu0 0
    %1371 = vmatprep.subr.bf16.mxu0 0
    %1372 = vmatpush1.bf16.xpose.msra.mxu0 0
    %1373 = vmatprep.subr.bf16.mxu0 0
    %1374 = vmatpush1.bf16.xpose.msra.mxu0 0
    %1375 = vmatprep.subr.bf16.mxu0 0
    %1376 = vmatpush1.bf16.xpose.msra.mxu0 0
    %1377 = vmatprep.subr.bf16.mxu0 0
    %1378 = vmatpush1.bf16.xpose.msra.mxu0 0
    %1379 = vmatprep.subr.bf16.mxu0 0
    %1380 = vmatpush1.bf16.xpose.msra.mxu0 0
    %1381 = vmatprep.subr.bf16.mxu0 0
    %1382 = vmatpush1.bf16.xpose.msra.mxu0 0
    %1383 = vmatprep.subr.bf16.mxu0 0
    %1384 = vmatpush1.bf16.xpose.msra.mxu0 %v1367
    %1385 = vmatprep.subr.bf16.mxu0 0
    %1386 = vmatpush2.bf16.xpose.msra.mxu0 0
    %1387 = vmatprep.subr.bf16.mxu0 0
    %1388 = vmatpush2.bf16.xpose.msra.mxu0 0
    %1389 = vmatprep.subr.bf16.mxu0 0
    %1390 = vmatpush2.bf16.xpose.msra.mxu0 0
    %1391 = vmatprep.subr.bf16.mxu0 0
    %1392 = vmatpush2.bf16.xpose.msra.mxu0 0
    %1393 = vmatprep.subr.bf16.mxu0 0
    %1394 = vmatpush2.bf16.xpose.msra.mxu0 0
    %1395 = vmatprep.subr.bf16.mxu0 0
    %1396 = vmatpush2.bf16.xpose.msra.mxu0 0
    %1397 = vmatprep.subr.bf16.mxu0 0
    %1398 = vmatpush2.bf16.xpose.msra.mxu0 0
    %1399 = vmatprep.subr.bf16.mxu0 0
    %1400 = vmatpush2.bf16.xpose.msra.mxu0 0
    %1401 = vmatprep.mubr.bf16.mxu0 0
    %1402 = vmatmul.mubr.bf16.gmra.mxu0 %v1364
    %v1403 = vpop.f32.mrf.mxu0
    %v1404 = vadd.f32 0.0, %v1403
    %v1405 = vpop.f32.mrf.mxu0
    %v1406 = vpop.f32.mrf.mxu0
    %v1407 = vpop.f32.mrf.mxu0
    %1408 = vdwg.mxu0
    %1409 = vrot.lane.b32.xlu0 %v254, 96
    %v1410 = vpop.permute.xlu0 %1409
    %v1411 = vrot.slane %v1410, 4
    %1412 = vrot.lane.b32.xlu0 %v255, 96
    %v1413 = vpop.permute.xlu0 %1412
    %v1414 = vrot.slane %v1413, 4
    %v1416 = vsel %vm94, %v1411, 0
    %v1419 = vsel %vm94, %v1414, 0
    %1421 = vmatprep.subr.bf16.mxu0 0
    %1422 = vmatpush1.bf16.xpose.msra.mxu0 0
    %1423 = vmatprep.subr.bf16.mxu0 0
    %1424 = vmatpush1.bf16.xpose.msra.mxu0 0
    %1425 = vmatprep.subr.bf16.mxu0 0
    %1426 = vmatpush1.bf16.xpose.msra.mxu0 0
    %1427 = vmatprep.subr.bf16.mxu0 0
    %1428 = vmatpush1.bf16.xpose.msra.mxu0 0
    %1429 = vmatprep.subr.bf16.mxu0 0
    %1430 = vmatpush1.bf16.xpose.msra.mxu0 0
    %1431 = vmatprep.subr.bf16.mxu0 0
    %1432 = vmatpush1.bf16.xpose.msra.mxu0 0
    %1433 = vmatprep.subr.bf16.mxu0 0
    %1434 = vmatpush1.bf16.xpose.msra.mxu0 0
    %1435 = vmatprep.subr.bf16.mxu0 0
    %1436 = vmatpush1.bf16.xpose.msra.mxu0 %v1419
    %1437 = vmatprep.subr.bf16.mxu0 0
    %1438 = vmatpush2.bf16.xpose.msra.mxu0 0
    %1439 = vmatprep.subr.bf16.mxu0 0
    %1440 = vmatpush2.bf16.xpose.msra.mxu0 0
    %1441 = vmatprep.subr.bf16.mxu0 0
    %1442 = vmatpush2.bf16.xpose.msra.mxu0 0
    %1443 = vmatprep.subr.bf16.mxu0 0
    %1444 = vmatpush2.bf16.xpose.msra.mxu0 0
    %1445 = vmatprep.subr.bf16.mxu0 0
    %1446 = vmatpush2.bf16.xpose.msra.mxu0 0
    %1447 = vmatprep.subr.bf16.mxu0 0
    %1448 = vmatpush2.bf16.xpose.msra.mxu0 0
    %1449 = vmatprep.subr.bf16.mxu0 0
    %1450 = vmatpush2.bf16.xpose.msra.mxu0 0
    %1451 = vmatprep.subr.bf16.mxu0 0
    %1452 = vmatpush2.bf16.xpose.msra.mxu0 0
    %1453 = vmatprep.mubr.bf16.mxu0 0
    %1454 = vmatmul.mubr.bf16.gmra.mxu0 %v1416
    %v1455 = vpop.f32.mrf.mxu0
    %v1456 = vadd.f32 0.0, %v1455
    %v1457 = vpop.f32.mrf.mxu0
    %v1458 = vpop.f32.mrf.mxu0
    %v1459 = vpop.f32.mrf.mxu0
    %1460 = vdwg.mxu0
    %v1461 = vsel %vm349, %v1404, -inf
    %1462 = vmax.xlane.f32.xlu0 %v1461
    %v1463 = vpop.xlane.xlu0 %1462
    %v1464 = vsel %vm349, %v1456, -inf
    %1465 = vmax.xlane.f32.xlu0 %v1464
    %v1466 = vpop.xlane.xlu0 %1465
    %v1467 = vsub.f32 %v1404, %v1463
    %v1468 = vsub.f32 %v1456, %v1466
    %v1469 = vmul.f32 %v1467, 1.442695
    %v1470 = vpow.pop %v1469
    %v1471 = vmul.f32 %v1468, 1.442695
    %v1472 = vpow.pop %v1471
    %v1473 = vsel %vm349, %v1470, 0.0
    %1474 = vadd.xlane.f32.xlu0 %v1473
    %v1475 = vpop.xlane.xlu0 %1474
    %v1476 = vsel %vm349, %v1472, 0.0
    %1477 = vadd.xlane.f32.xlu0 %v1476
    %v1478 = vpop.xlane.xlu0 %1477
    %v1479 = vrcp.pop %v1475
    %v1480 = vrcp.pop %v1478
    %v1481 = vmul.f32 %v1470, %v1479
    %v1482 = vmul.f32 %v1472, %v1480
    %v1483 = vpack.c.bf16 %v1481, %v1481
    %v1484 = vpack.c.bf16 %v1482, %v1482
    %1485 = vrot.lane.b32.xlu0 %v253, 96
    %v1486 = vpop.permute.xlu0 %1485
    %v1487 = vrot.slane %v1486, 4
    %v1489 = vsel %vm349, %v1483, 0
    %v1492 = vsel %vm377, %v1487, 0
    %1494 = vmatprep.subr.bf16.mxu0 0
    %1495 = vmatpush1.bf16.msra.mxu0 0
    %1496 = vmatprep.subr.bf16.mxu0 0
    %1497 = vmatpush1.bf16.msra.mxu0 0
    %1498 = vmatprep.subr.bf16.mxu0 0
    %1499 = vmatpush1.bf16.msra.mxu0 0
    %1500 = vmatprep.subr.bf16.mxu0 0
    %1501 = vmatpush1.bf16.msra.mxu0 0
    %1502 = vmatprep.subr.bf16.mxu0 0
    %1503 = vmatpush1.bf16.msra.mxu0 0
    %1504 = vmatprep.subr.bf16.mxu0 0
    %1505 = vmatpush1.bf16.msra.mxu0 0
    %1506 = vmatprep.subr.bf16.mxu0 0
    %1507 = vmatpush1.bf16.msra.mxu0 0
    %1508 = vmatprep.subr.bf16.mxu0 0
    %1509 = vmatpush1.bf16.msra.mxu0 %v1492
    %1510 = vmatprep.subr.bf16.mxu0 0
    %1511 = vmatpush2.bf16.msra.mxu0 0
    %1512 = vmatprep.subr.bf16.mxu0 0
    %1513 = vmatpush2.bf16.msra.mxu0 0
    %1514 = vmatprep.subr.bf16.mxu0 0
    %1515 = vmatpush2.bf16.msra.mxu0 0
    %1516 = vmatprep.subr.bf16.mxu0 0
    %1517 = vmatpush2.bf16.msra.mxu0 0
    %1518 = vmatprep.subr.bf16.mxu0 0
    %1519 = vmatpush2.bf16.msra.mxu0 0
    %1520 = vmatprep.subr.bf16.mxu0 0
    %1521 = vmatpush2.bf16.msra.mxu0 0
    %1522 = vmatprep.subr.bf16.mxu0 0
    %1523 = vmatpush2.bf16.msra.mxu0 0
    %1524 = vmatprep.subr.bf16.mxu0 0
    %1525 = vmatpush2.bf16.msra.mxu0 0
    %1526 = vmatprep.mubr.bf16.mxu0 0
    %1527 = vmatmul.mubr.bf16.gmra.mxu0 %v1489
    %v1528 = vpop.f32.mrf.mxu0
    %v1529 = vadd.f32 0.0, %v1528
    %v1530 = vpop.f32.mrf.mxu0
    %v1531 = vpop.f32.mrf.mxu0
    %v1532 = vpop.f32.mrf.mxu0
    %1533 = vdwg.mxu0
    %1534 = vrot.lane.b32.xlu0 %v256, 96
    %v1535 = vpop.permute.xlu0 %1534
    %v1536 = vrot.slane %v1535, 4
    %v1538 = vsel %vm349, %v1484, 0
    %v1541 = vsel %vm377, %v1536, 0
    %1543 = vmatprep.subr.bf16.mxu0 0
    %1544 = vmatpush1.bf16.msra.mxu0 0
    %1545 = vmatprep.subr.bf16.mxu0 0
    %1546 = vmatpush1.bf16.msra.mxu0 0
    %1547 = vmatprep.subr.bf16.mxu0 0
    %1548 = vmatpush1.bf16.msra.mxu0 0
    %1549 = vmatprep.subr.bf16.mxu0 0
    %1550 = vmatpush1.bf16.msra.mxu0 0
    %1551 = vmatprep.subr.bf16.mxu0 0
    %1552 = vmatpush1.bf16.msra.mxu0 0
    %1553 = vmatprep.subr.bf16.mxu0 0
    %1554 = vmatpush1.bf16.msra.mxu0 0
    %1555 = vmatprep.subr.bf16.mxu0 0
    %1556 = vmatpush1.bf16.msra.mxu0 0
    %1557 = vmatprep.subr.bf16.mxu0 0
    %1558 = vmatpush1.bf16.msra.mxu0 %v1541
    %1559 = vmatprep.subr.bf16.mxu0 0
    %1560 = vmatpush2.bf16.msra.mxu0 0
    %1561 = vmatprep.subr.bf16.mxu0 0
    %1562 = vmatpush2.bf16.msra.mxu0 0
    %1563 = vmatprep.subr.bf16.mxu0 0
    %1564 = vmatpush2.bf16.msra.mxu0 0
    %1565 = vmatprep.subr.bf16.mxu0 0
    %1566 = vmatpush2.bf16.msra.mxu0 0
    %1567 = vmatprep.subr.bf16.mxu0 0
    %1568 = vmatpush2.bf16.msra.mxu0 0
    %1569 = vmatprep.subr.bf16.mxu0 0
    %1570 = vmatpush2.bf16.msra.mxu0 0
    %1571 = vmatprep.subr.bf16.mxu0 0
    %1572 = vmatpush2.bf16.msra.mxu0 0
    %1573 = vmatprep.subr.bf16.mxu0 0
    %1574 = vmatpush2.bf16.msra.mxu0 0
    %1575 = vmatprep.mubr.bf16.mxu0 0
    %1576 = vmatmul.mubr.bf16.gmra.mxu0 %v1538
    %v1577 = vpop.f32.mrf.mxu0
    %v1578 = vadd.f32 0.0, %v1577
    %v1579 = vpop.f32.mrf.mxu0
    %v1580 = vpop.f32.mrf.mxu0
    %v1581 = vpop.f32.mrf.mxu0
    %1582 = vdwg.mxu0
    %v1583 = vpack.c.bf16 %v1529, %v1529
    %v1584 = vpack.c.bf16 %v1578, %v1578
    %1585 = vrot.lane.b32.xlu0 %v251, 64
    %v1586 = vpop.permute.xlu0 %1585
    %v1587 = vrot.slane %v1586, 4
    %1588 = vrot.lane.b32.xlu0 %v252, 64
    %v1589 = vpop.permute.xlu0 %1588
    %v1590 = vrot.slane %v1589, 4
    %v1592 = vsel %vm94, %v1587, 0
    %v1595 = vsel %vm94, %v1590, 0
    %1597 = vmatprep.subr.bf16.mxu0 0
    %1598 = vmatpush1.bf16.xpose.msra.mxu0 0
    %1599 = vmatprep.subr.bf16.mxu0 0
    %1600 = vmatpush1.bf16.xpose.msra.mxu0 0
    %1601 = vmatprep.subr.bf16.mxu0 0
    %1602 = vmatpush1.bf16.xpose.msra.mxu0 0
    %1603 = vmatprep.subr.bf16.mxu0 0
    %1604 = vmatpush1.bf16.xpose.msra.mxu0 0
    %1605 = vmatprep.subr.bf16.mxu0 0
    %1606 = vmatpush1.bf16.xpose.msra.mxu0 0
    %1607 = vmatprep.subr.bf16.mxu0 0
    %1608 = vmatpush1.bf16.xpose.msra.mxu0 0
    %1609 = vmatprep.subr.bf16.mxu0 0
    %1610 = vmatpush1.bf16.xpose.msra.mxu0 0
    %1611 = vmatprep.subr.bf16.mxu0 0
    %1612 = vmatpush1.bf16.xpose.msra.mxu0 %v1595
    %1613 = vmatprep.subr.bf16.mxu0 0
    %1614 = vmatpush2.bf16.xpose.msra.mxu0 0
    %1615 = vmatprep.subr.bf16.mxu0 0
    %1616 = vmatpush2.bf16.xpose.msra.mxu0 0
    %1617 = vmatprep.subr.bf16.mxu0 0
    %1618 = vmatpush2.bf16.xpose.msra.mxu0 0
    %1619 = vmatprep.subr.bf16.mxu0 0
    %1620 = vmatpush2.bf16.xpose.msra.mxu0 0
    %1621 = vmatprep.subr.bf16.mxu0 0
    %1622 = vmatpush2.bf16.xpose.msra.mxu0 0
    %1623 = vmatprep.subr.bf16.mxu0 0
    %1624 = vmatpush2.bf16.xpose.msra.mxu0 0
    %1625 = vmatprep.subr.bf16.mxu0 0
    %1626 = vmatpush2.bf16.xpose.msra.mxu0 0
    %1627 = vmatprep.subr.bf16.mxu0 0
    %1628 = vmatpush2.bf16.xpose.msra.mxu0 0
    %1629 = vmatprep.mubr.bf16.mxu0 0
    %1630 = vmatmul.mubr.bf16.gmra.mxu0 %v1592
    %v1631 = vpop.f32.mrf.mxu0
    %v1632 = vadd.f32 0.0, %v1631
    %v1633 = vpop.f32.mrf.mxu0
    %v1634 = vpop.f32.mrf.mxu0
    %v1635 = vpop.f32.mrf.mxu0
    %1636 = vdwg.mxu0
    %1637 = vrot.lane.b32.xlu0 %v254, 64
    %v1638 = vpop.permute.xlu0 %1637
    %v1639 = vrot.slane %v1638, 4
    %1640 = vrot.lane.b32.xlu0 %v255, 64
    %v1641 = vpop.permute.xlu0 %1640
    %v1642 = vrot.slane %v1641, 4
    %v1644 = vsel %vm94, %v1639, 0
    %v1647 = vsel %vm94, %v1642, 0
    %1649 = vmatprep.subr.bf16.mxu0 0
    %1650 = vmatpush1.bf16.xpose.msra.mxu0 0
    %1651 = vmatprep.subr.bf16.mxu0 0
    %1652 = vmatpush1.bf16.xpose.msra.mxu0 0
    %1653 = vmatprep.subr.bf16.mxu0 0
    %1654 = vmatpush1.bf16.xpose.msra.mxu0 0
    %1655 = vmatprep.subr.bf16.mxu0 0
    %1656 = vmatpush1.bf16.xpose.msra.mxu0 0
    %1657 = vmatprep.subr.bf16.mxu0 0
    %1658 = vmatpush1.bf16.xpose.msra.mxu0 0
    %1659 = vmatprep.subr.bf16.mxu0 0
    %1660 = vmatpush1.bf16.xpose.msra.mxu0 0
    %1661 = vmatprep.subr.bf16.mxu0 0
    %1662 = vmatpush1.bf16.xpose.msra.mxu0 0
    %1663 = vmatprep.subr.bf16.mxu0 0
    %1664 = vmatpush1.bf16.xpose.msra.mxu0 %v1647
    %1665 = vmatprep.subr.bf16.mxu0 0
    %1666 = vmatpush2.bf16.xpose.msra.mxu0 0
    %1667 = vmatprep.subr.bf16.mxu0 0
    %1668 = vmatpush2.bf16.xpose.msra.mxu0 0
    %1669 = vmatprep.subr.bf16.mxu0 0
    %1670 = vmatpush2.bf16.xpose.msra.mxu0 0
    %1671 = vmatprep.subr.bf16.mxu0 0
    %1672 = vmatpush2.bf16.xpose.msra.mxu0 0
    %1673 = vmatprep.subr.bf16.mxu0 0
    %1674 = vmatpush2.bf16.xpose.msra.mxu0 0
    %1675 = vmatprep.subr.bf16.mxu0 0
    %1676 = vmatpush2.bf16.xpose.msra.mxu0 0
    %1677 = vmatprep.subr.bf16.mxu0 0
    %1678 = vmatpush2.bf16.xpose.msra.mxu0 0
    %1679 = vmatprep.subr.bf16.mxu0 0
    %1680 = vmatpush2.bf16.xpose.msra.mxu0 0
    %1681 = vmatprep.mubr.bf16.mxu0 0
    %1682 = vmatmul.mubr.bf16.gmra.mxu0 %v1644
    %v1683 = vpop.f32.mrf.mxu0
    %v1684 = vadd.f32 0.0, %v1683
    %v1685 = vpop.f32.mrf.mxu0
    %v1686 = vpop.f32.mrf.mxu0
    %v1687 = vpop.f32.mrf.mxu0
    %1688 = vdwg.mxu0
    %v1689 = vsel %vm349, %v1632, -inf
    %1690 = vmax.xlane.f32.xlu0 %v1689
    %v1691 = vpop.xlane.xlu0 %1690
    %v1692 = vsel %vm349, %v1684, -inf
    %1693 = vmax.xlane.f32.xlu0 %v1692
    %v1694 = vpop.xlane.xlu0 %1693
    %v1695 = vsub.f32 %v1632, %v1691
    %v1696 = vsub.f32 %v1684, %v1694
    %v1697 = vmul.f32 %v1695, 1.442695
    %v1698 = vpow.pop %v1697
    %v1699 = vmul.f32 %v1696, 1.442695
    %v1700 = vpow.pop %v1699
    %v1701 = vsel %vm349, %v1698, 0.0
    %1702 = vadd.xlane.f32.xlu0 %v1701
    %v1703 = vpop.xlane.xlu0 %1702
    %v1704 = vsel %vm349, %v1700, 0.0
    %1705 = vadd.xlane.f32.xlu0 %v1704
    %v1706 = vpop.xlane.xlu0 %1705
    %v1707 = vrcp.pop %v1703
    %v1708 = vrcp.pop %v1706
    %v1709 = vmul.f32 %v1698, %v1707
    %v1710 = vmul.f32 %v1700, %v1708
    %v1711 = vpack.c.bf16 %v1709, %v1709
    %v1712 = vpack.c.bf16 %v1710, %v1710
    %1713 = vrot.lane.b32.xlu0 %v253, 64
    %v1714 = vpop.permute.xlu0 %1713
    %v1715 = vrot.slane %v1714, 4
    %v1717 = vsel %vm349, %v1711, 0
    %v1720 = vsel %vm377, %v1715, 0
    %1722 = vmatprep.subr.bf16.mxu0 0
    %1723 = vmatpush1.bf16.msra.mxu0 0
    %1724 = vmatprep.subr.bf16.mxu0 0
    %1725 = vmatpush1.bf16.msra.mxu0 0
    %1726 = vmatprep.subr.bf16.mxu0 0
    %1727 = vmatpush1.bf16.msra.mxu0 0
    %1728 = vmatprep.subr.bf16.mxu0 0
    %1729 = vmatpush1.bf16.msra.mxu0 0
    %1730 = vmatprep.subr.bf16.mxu0 0
    %1731 = vmatpush1.bf16.msra.mxu0 0
    %1732 = vmatprep.subr.bf16.mxu0 0
    %1733 = vmatpush1.bf16.msra.mxu0 0
    %1734 = vmatprep.subr.bf16.mxu0 0
    %1735 = vmatpush1.bf16.msra.mxu0 0
    %1736 = vmatprep.subr.bf16.mxu0 0
    %1737 = vmatpush1.bf16.msra.mxu0 %v1720
    %1738 = vmatprep.subr.bf16.mxu0 0
    %1739 = vmatpush2.bf16.msra.mxu0 0
    %1740 = vmatprep.subr.bf16.mxu0 0
    %1741 = vmatpush2.bf16.msra.mxu0 0
    %1742 = vmatprep.subr.bf16.mxu0 0
    %1743 = vmatpush2.bf16.msra.mxu0 0
    %1744 = vmatprep.subr.bf16.mxu0 0
    %1745 = vmatpush2.bf16.msra.mxu0 0
    %1746 = vmatprep.subr.bf16.mxu0 0
    %1747 = vmatpush2.bf16.msra.mxu0 0
    %1748 = vmatprep.subr.bf16.mxu0 0
    %1749 = vmatpush2.bf16.msra.mxu0 0
    %1750 = vmatprep.subr.bf16.mxu0 0
    %1751 = vmatpush2.bf16.msra.mxu0 0
    %1752 = vmatprep.subr.bf16.mxu0 0
    %1753 = vmatpush2.bf16.msra.mxu0 0
    %1754 = vmatprep.mubr.bf16.mxu0 0
    %1755 = vmatmul.mubr.bf16.gmra.mxu0 %v1717
    %v1756 = vpop.f32.mrf.mxu0
    %v1757 = vadd.f32 0.0, %v1756
    %v1758 = vpop.f32.mrf.mxu0
    %v1759 = vpop.f32.mrf.mxu0
    %v1760 = vpop.f32.mrf.mxu0
    %1761 = vdwg.mxu0
    %1762 = vrot.lane.b32.xlu0 %v256, 64
    %v1763 = vpop.permute.xlu0 %1762
    %v1764 = vrot.slane %v1763, 4
    %v1766 = vsel %vm349, %v1712, 0
    %v1769 = vsel %vm377, %v1764, 0
    %1771 = vmatprep.subr.bf16.mxu0 0
    %1772 = vmatpush1.bf16.msra.mxu0 0
    %1773 = vmatprep.subr.bf16.mxu0 0
    %1774 = vmatpush1.bf16.msra.mxu0 0
    %1775 = vmatprep.subr.bf16.mxu0 0
    %1776 = vmatpush1.bf16.msra.mxu0 0
    %1777 = vmatprep.subr.bf16.mxu0 0
    %1778 = vmatpush1.bf16.msra.mxu0 0
    %1779 = vmatprep.subr.bf16.mxu0 0
    %1780 = vmatpush1.bf16.msra.mxu0 0
    %1781 = vmatprep.subr.bf16.mxu0 0
    %1782 = vmatpush1.bf16.msra.mxu0 0
    %1783 = vmatprep.subr.bf16.mxu0 0
    %1784 = vmatpush1.bf16.msra.mxu0 0
    %1785 = vmatprep.subr.bf16.mxu0 0
    %1786 = vmatpush1.bf16.msra.mxu0 %v1769
    %1787 = vmatprep.subr.bf16.mxu0 0
    %1788 = vmatpush2.bf16.msra.mxu0 0
    %1789 = vmatprep.subr.bf16.mxu0 0
    %1790 = vmatpush2.bf16.msra.mxu0 0
    %1791 = vmatprep.subr.bf16.mxu0 0
    %1792 = vmatpush2.bf16.msra.mxu0 0
    %1793 = vmatprep.subr.bf16.mxu0 0
    %1794 = vmatpush2.bf16.msra.mxu0 0
    %1795 = vmatprep.subr.bf16.mxu0 0
    %1796 = vmatpush2.bf16.msra.mxu0 0
    %1797 = vmatprep.subr.bf16.mxu0 0
    %1798 = vmatpush2.bf16.msra.mxu0 0
    %1799 = vmatprep.subr.bf16.mxu0 0
    %1800 = vmatpush2.bf16.msra.mxu0 0
    %1801 = vmatprep.subr.bf16.mxu0 0
    %1802 = vmatpush2.bf16.msra.mxu0 0
    %1803 = vmatprep.mubr.bf16.mxu0 0
    %1804 = vmatmul.mubr.bf16.gmra.mxu0 %v1766
    %v1805 = vpop.f32.mrf.mxu0
    %v1806 = vadd.f32 0.0, %v1805
    %v1807 = vpop.f32.mrf.mxu0
    %v1808 = vpop.f32.mrf.mxu0
    %v1809 = vpop.f32.mrf.mxu0
    %1810 = vdwg.mxu0
    %v1811 = vpack.c.bf16 %v1757, %v1757
    %v1812 = vpack.c.bf16 %v1806, %v1806
    %1813 = vrot.lane.b32.xlu0 %v251, 32
    %v1814 = vpop.permute.xlu0 %1813
    %v1815 = vrot.slane %v1814, 4
    %1816 = vrot.lane.b32.xlu0 %v252, 32
    %v1817 = vpop.permute.xlu0 %1816
    %v1818 = vrot.slane %v1817, 4
    %v1820 = vsel %vm94, %v1815, 0
    %v1823 = vsel %vm94, %v1818, 0
    %1825 = vmatprep.subr.bf16.mxu0 0
    %1826 = vmatpush1.bf16.xpose.msra.mxu0 0
    %1827 = vmatprep.subr.bf16.mxu0 0
    %1828 = vmatpush1.bf16.xpose.msra.mxu0 0
    %1829 = vmatprep.subr.bf16.mxu0 0
    %1830 = vmatpush1.bf16.xpose.msra.mxu0 0
    %1831 = vmatprep.subr.bf16.mxu0 0
    %1832 = vmatpush1.bf16.xpose.msra.mxu0 0
    %1833 = vmatprep.subr.bf16.mxu0 0
    %1834 = vmatpush1.bf16.xpose.msra.mxu0 0
    %1835 = vmatprep.subr.bf16.mxu0 0
    %1836 = vmatpush1.bf16.xpose.msra.mxu0 0
    %1837 = vmatprep.subr.bf16.mxu0 0
    %1838 = vmatpush1.bf16.xpose.msra.mxu0 0
    %1839 = vmatprep.subr.bf16.mxu0 0
    %1840 = vmatpush1.bf16.xpose.msra.mxu0 %v1823
    %1841 = vmatprep.subr.bf16.mxu0 0
    %1842 = vmatpush2.bf16.xpose.msra.mxu0 0
    %1843 = vmatprep.subr.bf16.mxu0 0
    %1844 = vmatpush2.bf16.xpose.msra.mxu0 0
    %1845 = vmatprep.subr.bf16.mxu0 0
    %1846 = vmatpush2.bf16.xpose.msra.mxu0 0
    %1847 = vmatprep.subr.bf16.mxu0 0
    %1848 = vmatpush2.bf16.xpose.msra.mxu0 0
    %1849 = vmatprep.subr.bf16.mxu0 0
    %1850 = vmatpush2.bf16.xpose.msra.mxu0 0
    %1851 = vmatprep.subr.bf16.mxu0 0
    %1852 = vmatpush2.bf16.xpose.msra.mxu0 0
    %1853 = vmatprep.subr.bf16.mxu0 0
    %1854 = vmatpush2.bf16.xpose.msra.mxu0 0
    %1855 = vmatprep.subr.bf16.mxu0 0
    %1856 = vmatpush2.bf16.xpose.msra.mxu0 0
    %1857 = vmatprep.mubr.bf16.mxu0 0
    %1858 = vmatmul.mubr.bf16.gmra.mxu0 %v1820
    %v1859 = vpop.f32.mrf.mxu0
    %v1860 = vadd.f32 0.0, %v1859
    %v1861 = vpop.f32.mrf.mxu0
    %v1862 = vpop.f32.mrf.mxu0
    %v1863 = vpop.f32.mrf.mxu0
    %1864 = vdwg.mxu0
    %1865 = vrot.lane.b32.xlu0 %v254, 32
    %v1866 = vpop.permute.xlu0 %1865
    %v1867 = vrot.slane %v1866, 4
    %1868 = vrot.lane.b32.xlu0 %v255, 32
    %v1869 = vpop.permute.xlu0 %1868
    %v1870 = vrot.slane %v1869, 4
    %v1872 = vsel %vm94, %v1867, 0
    %v1875 = vsel %vm94, %v1870, 0
    %1877 = vmatprep.subr.bf16.mxu0 0
    %1878 = vmatpush1.bf16.xpose.msra.mxu0 0
    %1879 = vmatprep.subr.bf16.mxu0 0
    %1880 = vmatpush1.bf16.xpose.msra.mxu0 0
    %1881 = vmatprep.subr.bf16.mxu0 0
    %1882 = vmatpush1.bf16.xpose.msra.mxu0 0
    %1883 = vmatprep.subr.bf16.mxu0 0
    %1884 = vmatpush1.bf16.xpose.msra.mxu0 0
    %1885 = vmatprep.subr.bf16.mxu0 0
    %1886 = vmatpush1.bf16.xpose.msra.mxu0 0
    %1887 = vmatprep.subr.bf16.mxu0 0
    %1888 = vmatpush1.bf16.xpose.msra.mxu0 0
    %1889 = vmatprep.subr.bf16.mxu0 0
    %1890 = vmatpush1.bf16.xpose.msra.mxu0 0
    %1891 = vmatprep.subr.bf16.mxu0 0
    %1892 = vmatpush1.bf16.xpose.msra.mxu0 %v1875
    %1893 = vmatprep.subr.bf16.mxu0 0
    %1894 = vmatpush2.bf16.xpose.msra.mxu0 0
    %1895 = vmatprep.subr.bf16.mxu0 0
    %1896 = vmatpush2.bf16.xpose.msra.mxu0 0
    %1897 = vmatprep.subr.bf16.mxu0 0
    %1898 = vmatpush2.bf16.xpose.msra.mxu0 0
    %1899 = vmatprep.subr.bf16.mxu0 0
    %1900 = vmatpush2.bf16.xpose.msra.mxu0 0
    %1901 = vmatprep.subr.bf16.mxu0 0
    %1902 = vmatpush2.bf16.xpose.msra.mxu0 0
    %1903 = vmatprep.subr.bf16.mxu0 0
    %1904 = vmatpush2.bf16.xpose.msra.mxu0 0
    %1905 = vmatprep.subr.bf16.mxu0 0
    %1906 = vmatpush2.bf16.xpose.msra.mxu0 0
    %1907 = vmatprep.subr.bf16.mxu0 0
    %1908 = vmatpush2.bf16.xpose.msra.mxu0 0
    %1909 = vmatprep.mubr.bf16.mxu0 0
    %1910 = vmatmul.mubr.bf16.gmra.mxu0 %v1872
    %v1911 = vpop.f32.mrf.mxu0
    %v1912 = vadd.f32 0.0, %v1911
    %v1913 = vpop.f32.mrf.mxu0
    %v1914 = vpop.f32.mrf.mxu0
    %v1915 = vpop.f32.mrf.mxu0
    %1916 = vdwg.mxu0
    %v1917 = vsel %vm349, %v1860, -inf
    %1918 = vmax.xlane.f32.xlu0 %v1917
    %v1919 = vpop.xlane.xlu0 %1918
    %v1920 = vsel %vm349, %v1912, -inf
    %1921 = vmax.xlane.f32.xlu0 %v1920
    %v1922 = vpop.xlane.xlu0 %1921
    %v1923 = vsub.f32 %v1860, %v1919
    %v1924 = vsub.f32 %v1912, %v1922
    %v1925 = vmul.f32 %v1923, 1.442695
    %v1926 = vpow.pop %v1925
    %v1927 = vmul.f32 %v1924, 1.442695
    %v1928 = vpow.pop %v1927
    %v1929 = vsel %vm349, %v1926, 0.0
    %1930 = vadd.xlane.f32.xlu0 %v1929
    %v1931 = vpop.xlane.xlu0 %1930
    %v1932 = vsel %vm349, %v1928, 0.0
    %1933 = vadd.xlane.f32.xlu0 %v1932
    %v1934 = vpop.xlane.xlu0 %1933
    %v1935 = vrcp.pop %v1931
    %v1936 = vrcp.pop %v1934
    %v1937 = vmul.f32 %v1926, %v1935
    %v1938 = vmul.f32 %v1928, %v1936
    %v1939 = vpack.c.bf16 %v1937, %v1937
    %v1940 = vpack.c.bf16 %v1938, %v1938
    %1941 = vrot.lane.b32.xlu0 %v253, 32
    %v1942 = vpop.permute.xlu0 %1941
    %v1943 = vrot.slane %v1942, 4
    %v1945 = vsel %vm349, %v1939, 0
    %v1948 = vsel %vm377, %v1943, 0
    %1950 = vmatprep.subr.bf16.mxu0 0
    %1951 = vmatpush1.bf16.msra.mxu0 0
    %1952 = vmatprep.subr.bf16.mxu0 0
    %1953 = vmatpush1.bf16.msra.mxu0 0
    %1954 = vmatprep.subr.bf16.mxu0 0
    %1955 = vmatpush1.bf16.msra.mxu0 0
    %1956 = vmatprep.subr.bf16.mxu0 0
    %1957 = vmatpush1.bf16.msra.mxu0 0
    %1958 = vmatprep.subr.bf16.mxu0 0
    %1959 = vmatpush1.bf16.msra.mxu0 0
    %1960 = vmatprep.subr.bf16.mxu0 0
    %1961 = vmatpush1.bf16.msra.mxu0 0
    %1962 = vmatprep.subr.bf16.mxu0 0
    %1963 = vmatpush1.bf16.msra.mxu0 0
    %1964 = vmatprep.subr.bf16.mxu0 0
    %1965 = vmatpush1.bf16.msra.mxu0 %v1948
    %1966 = vmatprep.subr.bf16.mxu0 0
    %1967 = vmatpush2.bf16.msra.mxu0 0
    %1968 = vmatprep.subr.bf16.mxu0 0
    %1969 = vmatpush2.bf16.msra.mxu0 0
    %1970 = vmatprep.subr.bf16.mxu0 0
    %1971 = vmatpush2.bf16.msra.mxu0 0
    %1972 = vmatprep.subr.bf16.mxu0 0
    %1973 = vmatpush2.bf16.msra.mxu0 0
    %1974 = vmatprep.subr.bf16.mxu0 0
    %1975 = vmatpush2.bf16.msra.mxu0 0
    %1976 = vmatprep.subr.bf16.mxu0 0
    %1977 = vmatpush2.bf16.msra.mxu0 0
    %1978 = vmatprep.subr.bf16.mxu0 0
    %1979 = vmatpush2.bf16.msra.mxu0 0
    %1980 = vmatprep.subr.bf16.mxu0 0
    %1981 = vmatpush2.bf16.msra.mxu0 0
    %1982 = vmatprep.mubr.bf16.mxu0 0
    %1983 = vmatmul.mubr.bf16.gmra.mxu0 %v1945
    %v1984 = vpop.f32.mrf.mxu0
    %v1985 = vadd.f32 0.0, %v1984
    %v1986 = vpop.f32.mrf.mxu0
    %v1987 = vpop.f32.mrf.mxu0
    %v1988 = vpop.f32.mrf.mxu0
    %1989 = vdwg.mxu0
    %1990 = vrot.lane.b32.xlu0 %v256, 32
    %v1991 = vpop.permute.xlu0 %1990
    %v1992 = vrot.slane %v1991, 4
    %v1994 = vsel %vm349, %v1940, 0
    %v1997 = vsel %vm377, %v1992, 0
    %1999 = vmatprep.subr.bf16.mxu0 0
    %2000 = vmatpush1.bf16.msra.mxu0 0
    %2001 = vmatprep.subr.bf16.mxu0 0
    %2002 = vmatpush1.bf16.msra.mxu0 0
    %2003 = vmatprep.subr.bf16.mxu0 0
    %2004 = vmatpush1.bf16.msra.mxu0 0
    %2005 = vmatprep.subr.bf16.mxu0 0
    %2006 = vmatpush1.bf16.msra.mxu0 0
    %2007 = vmatprep.subr.bf16.mxu0 0
    %2008 = vmatpush1.bf16.msra.mxu0 0
    %2009 = vmatprep.subr.bf16.mxu0 0
    %2010 = vmatpush1.bf16.msra.mxu0 0
    %2011 = vmatprep.subr.bf16.mxu0 0
    %2012 = vmatpush1.bf16.msra.mxu0 0
    %2013 = vmatprep.subr.bf16.mxu0 0
    %2014 = vmatpush1.bf16.msra.mxu0 %v1997
    %2015 = vmatprep.subr.bf16.mxu0 0
    %2016 = vmatpush2.bf16.msra.mxu0 0
    %2017 = vmatprep.subr.bf16.mxu0 0
    %2018 = vmatpush2.bf16.msra.mxu0 0
    %2019 = vmatprep.subr.bf16.mxu0 0
    %2020 = vmatpush2.bf16.msra.mxu0 0
    %2021 = vmatprep.subr.bf16.mxu0 0
    %2022 = vmatpush2.bf16.msra.mxu0 0
    %2023 = vmatprep.subr.bf16.mxu0 0
    %2024 = vmatpush2.bf16.msra.mxu0 0
    %2025 = vmatprep.subr.bf16.mxu0 0
    %2026 = vmatpush2.bf16.msra.mxu0 0
    %2027 = vmatprep.subr.bf16.mxu0 0
    %2028 = vmatpush2.bf16.msra.mxu0 0
    %2029 = vmatprep.subr.bf16.mxu0 0
    %2030 = vmatpush2.bf16.msra.mxu0 0
    %2031 = vmatprep.mubr.bf16.mxu0 0
    %2032 = vmatmul.mubr.bf16.gmra.mxu0 %v1994
    %v2033 = vpop.f32.mrf.mxu0
    %v2034 = vadd.f32 0.0, %v2033
    %v2035 = vpop.f32.mrf.mxu0
    %v2036 = vpop.f32.mrf.mxu0
    %v2037 = vpop.f32.mrf.mxu0
    %2038 = vdwg.mxu0
    %v2039 = vpack.c.bf16 %v1985, %v1985
    %v2040 = vpack.c.bf16 %v2034, %v2034
    %2043 = vrot.lane.b32.xlu0 %v695, 32
    %v2044 = vpop.permute.xlu0 %2043
    %2045 = vrot.lane.b32.xlu0 %v696, 32
    %v2046 = vpop.permute.xlu0 %2045
    %2049 = vrot.lane.b32.xlu0 %v917, 64
    %v2050 = vpop.permute.xlu0 %2049
    %2051 = vrot.lane.b32.xlu0 %v918, 64
    %v2052 = vpop.permute.xlu0 %2051
    %2055 = vrot.lane.b32.xlu0 %v1139, 96
    %v2056 = vpop.permute.xlu0 %2055
    %2057 = vrot.lane.b32.xlu0 %v1140, 96
    %v2058 = vpop.permute.xlu0 %2057
    %2061 = vrot.lane.b32.xlu0 %v1583, 32
    %v2062 = vpop.permute.xlu0 %2061
    %2063 = vrot.lane.b32.xlu0 %v1584, 32
    %v2064 = vpop.permute.xlu0 %2063
    %2067 = vrot.lane.b32.xlu0 %v1811, 64
    %v2068 = vpop.permute.xlu0 %2067
    %2069 = vrot.lane.b32.xlu0 %v1812, 64
    %v2070 = vpop.permute.xlu0 %2069
    %2073 = vrot.lane.b32.xlu0 %v2039, 96
    %v2074 = vpop.permute.xlu0 %2073
    %2075 = vrot.lane.b32.xlu0 %v2040, 96
    %v2076 = vpop.permute.xlu0 %2075
    %v2079 = vsel %vm94, %v467, %v2044
    %v2082 = vsel %vm94, %v468, %v2046
    %vm2083 = vcmask 523264
    %v2085 = vsel %vm2083, %v2079, %v2050
    %v2087 = vsel %vm2083, %v2082, %v2052
    %vm2088 = vcmask 785408
    %v2090 = vsel %vm2088, %v2085, %v2056
    %v2092 = vsel %vm2088, %v2087, %v2058
    %v2095 = vsel %vm94, %v1355, %v2062
    %v2098 = vsel %vm94, %v1356, %v2064
    %v2100 = vsel %vm2083, %v2095, %v2068
    %v2102 = vsel %vm2083, %v2098, %v2070
    %v2104 = vsel %vm2088, %v2100, %v2074
    %v2106 = vsel %vm2088, %v2102, %v2076
    %v2111 = vunpack.c.l.b16 %v2090
    %v2112 = vunpack.c.l.b16 %v2104
    %v2113 = vunpack.c.l.b16 %v2092
    %v2114 = vunpack.c.l.b16 %v2106
    %v2115 = vld [vmem:[%s2] sm:$0xf]
    %v2116 = vld [vmem:[%s2 + $0x4] sm:$0xf]
    %v2117 = vld [vmem:[%s2 + $0x8] sm:$0xf]
    %v2118 = vld [vmem:[%s2 + $0xc] sm:$0xf]
    %v2119 = vld [vmem:[%s2 + $0x10] sm:$0xf]
    %v2120 = vld [vmem:[%s2 + $0x14] sm:$0xf]
    %v2121 = vld [vmem:[%s2 + $0x18] sm:$0xf]
    %v2122 = vld [vmem:[%s2 + $0x1c] sm:$0xf]
    %v2123 = vld [vmem:[%s2 + $0x20] sm:$0xf]
    %v2124 = vld [vmem:[%s2 + $0x24] sm:$0xf]
    %v2125 = vld [vmem:[%s2 + $0x28] sm:$0xf]
    %v2126 = vld [vmem:[%s2 + $0x2c] sm:$0xf]
    %v2127 = vld [vmem:[%s2 + $0x30] sm:$0xf]
    %v2128 = vld [vmem:[%s2 + $0x34] sm:$0xf]
    %v2129 = vld [vmem:[%s2 + $0x38] sm:$0xf]
    %v2130 = vld [vmem:[%s2 + $0x3c] sm:$0xf]
    %v2131 = vld [vmem:[%s2 + $0x40] sm:$0xf]
    %v2132 = vld [vmem:[%s2 + $0x44] sm:$0xf]
    %v2133 = vld [vmem:[%s2 + $0x48] sm:$0xf]
    %v2134 = vld [vmem:[%s2 + $0x4c] sm:$0xf]
    %v2135 = vld [vmem:[%s2 + $0x50] sm:$0xf]
    %v2136 = vld [vmem:[%s2 + $0x54] sm:$0xf]
    %v2137 = vld [vmem:[%s2 + $0x58] sm:$0xf]
    %v2138 = vld [vmem:[%s2 + $0x5c] sm:$0xf]
    %v2139 = vld [vmem:[%s2 + $0x60] sm:$0xf]
    %v2140 = vld [vmem:[%s2 + $0x64] sm:$0xf]
    %v2141 = vld [vmem:[%s2 + $0x68] sm:$0xf]
    %v2142 = vld [vmem:[%s2 + $0x6c] sm:$0xf]
    %v2143 = vld [vmem:[%s2 + $0x70] sm:$0xf]
    %v2144 = vld [vmem:[%s2 + $0x74] sm:$0xf]
    %v2145 = vld [vmem:[%s2 + $0x78] sm:$0xf]
    %v2146 = vld [vmem:[%s2 + $0x7c] sm:$0xf]
    %v2147 = vld [vmem:[%s3] sm:$0x1]
    %v2149 = vlaneseq
    %v2150 = vshrl.u32 %v2149, 7
    %v2151 = vsub.s32 0, %v2150
    %v2152 = vrot.slane %v2147, %v2151
    %v2154 = vpack.c.b16 %v2113, %v2111
    %v2155 = vpack.c.b16 %v2114, %v2112
    %v2190 = vunpack.c.l.b16 %v2115
    %v2191 = vunpack.c.l.b16 %v2116
    %v2192 = vunpack.c.l.b16 %v2117
    %v2193 = vunpack.c.l.b16 %v2118
    %v2194 = vunpack.c.l.b16 %v2119
    %v2195 = vunpack.c.l.b16 %v2120
    %v2196 = vunpack.c.l.b16 %v2121
    %v2197 = vunpack.c.l.b16 %v2122
    %v2198 = vunpack.c.l.b16 %v2123
    %v2199 = vunpack.c.l.b16 %v2124
    %v2200 = vunpack.c.l.b16 %v2125
    %v2201 = vunpack.c.l.b16 %v2126
    %v2202 = vunpack.c.l.b16 %v2127
    %v2203 = vunpack.c.l.b16 %v2128
    %v2204 = vunpack.c.l.b16 %v2129
    %v2205 = vunpack.c.l.b16 %v2130
    %v2206 = vunpack.c.l.b16 %v2131
    %v2207 = vunpack.c.l.b16 %v2132
    %v2208 = vunpack.c.l.b16 %v2133
    %v2209 = vunpack.c.l.b16 %v2134
    %v2210 = vunpack.c.l.b16 %v2135
    %v2211 = vunpack.c.l.b16 %v2136
    %v2212 = vunpack.c.l.b16 %v2137
    %v2213 = vunpack.c.l.b16 %v2138
    %v2214 = vunpack.c.l.b16 %v2139
    %v2215 = vunpack.c.l.b16 %v2140
    %v2216 = vunpack.c.l.b16 %v2141
    %v2217 = vunpack.c.l.b16 %v2142
    %v2218 = vunpack.c.l.b16 %v2143
    %v2219 = vunpack.c.l.b16 %v2144
    %v2220 = vunpack.c.l.b16 %v2145
    %v2221 = vunpack.c.l.b16 %v2146
    %v2222 = vpack.c.b16 %v2191, %v2190
    %v2223 = vpack.c.b16 %v2193, %v2192
    %v2224 = vpack.c.b16 %v2195, %v2194
    %v2225 = vpack.c.b16 %v2197, %v2196
    %v2226 = vpack.c.b16 %v2199, %v2198
    %v2227 = vpack.c.b16 %v2201, %v2200
    %v2228 = vpack.c.b16 %v2203, %v2202
    %v2229 = vpack.c.b16 %v2205, %v2204
    %v2230 = vpack.c.b16 %v2207, %v2206
    %v2231 = vpack.c.b16 %v2209, %v2208
    %v2232 = vpack.c.b16 %v2211, %v2210
    %v2233 = vpack.c.b16 %v2213, %v2212
    %v2234 = vpack.c.b16 %v2215, %v2214
    %v2235 = vpack.c.b16 %v2217, %v2216
    %v2236 = vpack.c.b16 %v2219, %v2218
    %v2237 = vpack.c.b16 %v2221, %v2220
    %2254 = vmatprep.subr.bf16.mxu0 0
    %2255 = vmatpush1.bf16.msra.mxu0 %v2229
    %2256 = vmatprep.subr.bf16.mxu0 0
    %2257 = vmatpush1.bf16.msra.mxu0 %v2228
    %2258 = vmatprep.subr.bf16.mxu0 0
    %2259 = vmatpush1.bf16.msra.mxu0 %v2227
    %2260 = vmatprep.subr.bf16.mxu0 0
    %2261 = vmatpush1.bf16.msra.mxu0 %v2226
    %2262 = vmatprep.subr.bf16.mxu0 0
    %2263 = vmatpush1.bf16.msra.mxu0 %v2225
    %2264 = vmatprep.subr.bf16.mxu0 0
    %2265 = vmatpush1.bf16.msra.mxu0 %v2224
    %2266 = vmatprep.subr.bf16.mxu0 0
    %2267 = vmatpush1.bf16.msra.mxu0 %v2223
    %2268 = vmatprep.subr.bf16.mxu0 0
    %2269 = vmatpush1.bf16.msra.mxu0 %v2222
    %2270 = vmatprep.subr.bf16.mxu0 0
    %2271 = vmatpush2.bf16.msra.mxu0 %v2237
    %2272 = vmatprep.subr.bf16.mxu0 0
    %2273 = vmatpush2.bf16.msra.mxu0 %v2236
    %2274 = vmatprep.subr.bf16.mxu0 0
    %2275 = vmatpush2.bf16.msra.mxu0 %v2235
    %2276 = vmatprep.subr.bf16.mxu0 0
    %2277 = vmatpush2.bf16.msra.mxu0 %v2234
    %2278 = vmatprep.subr.bf16.mxu0 0
    %2279 = vmatpush2.bf16.msra.mxu0 %v2233
    %2280 = vmatprep.subr.bf16.mxu0 0
    %2281 = vmatpush2.bf16.msra.mxu0 %v2232
    %2282 = vmatprep.subr.bf16.mxu0 0
    %2283 = vmatpush2.bf16.msra.mxu0 %v2231
    %2284 = vmatprep.subr.bf16.mxu0 0
    %2285 = vmatpush2.bf16.msra.mxu0 %v2230
    %2286 = vmatprep.mubr.bf16.mxu0 %v2155
    %2287 = vmatmul.mubr.bf16.gmra.mxu0 %v2154
    %v2288 = vpop.f32.mrf.mxu0
    %v2289 = vadd.f32 %v2152, %v2288
    %v2290 = vpop.f32.mrf.mxu0
    %v2291 = vpop.f32.mrf.mxu0
    %v2292 = vadd.f32 %v2152, %v2291
    %v2293 = vpop.f32.mrf.mxu0
    %2294 = vdwg.mxu0
    %2295 = vst.msk [vmem:[#allocation2] sm:$0xff] %vm94, %v2289
    %2296 = vst.msk [vmem:[#allocation2 + $0x8] sm:$0xff] %vm94, %v2292
    // Predicated region
    $region18: #{tpu_custom_call.1} parent=1 // pred_check
      _
    $region19: #{tpu_custom_call.1} parent=1 // pred_check_branch
      %2298 = sbr.rel (0) target = $region21
    $region20: #{tpu_custom_call.1} parent=1 // pred_region
      %s2300 = ssub.s32 256, 256
      %2301 = vsyncadd [#allocation3], %s2300
      %s2302 = sshll.u32 [#allocation2], 4
      %s2303 = int_to_ptr.vmem [resolvable:$true] %s2302
      %2308 = dma.vmem_to_hbm [thread:$0]  %s2303, 256, %s4, [#allocation3], 128, 128, 8
    $region21: #{tpu_custom_call.1} parent=1 // pred_fallthru
      _
    // Predicated region
    $region22: #{tpu_custom_call.1} parent=1 // pred_check
      _
    $region23: #{tpu_custom_call.1} parent=1 // pred_check_branch
      %2310 = sbr.rel (0) target = $region25
    $region24: #{tpu_custom_call.1} parent=1 // pred_region
      %2311 = dma.done [#allocation3], 256
    $region25: #{tpu_custom_call.1} parent=1 // pred_fallthru
      _
    %2312 = vsyncpa [#allocation3], 1

</llo_original>
